<compile_context>
chip_gen: v7x
topology: tpu7x:2x2x1
jax: 0.10.0
libtpu: 0.0.40
codegen_flags: <defaults>
</compile_context>

<pallas_src>
import math

import jax
import jax.numpy as jnp
from jax.experimental import pallas as pl
from jax.experimental.pallas import tpu as pltpu  # noqa: F401

EMBED_DIM = 32
NUM_HEADS = 4
HEAD_DIM = EMBED_DIM // NUM_HEADS
SEQ = 8
BATCH = 2
EPS = 1e-5  # nn.LayerNorm default eps

assert SEQ & (SEQ - 1) == 0, "SEQ must be a power of two for the shift-based batch mask"
_SEQ_SHIFT = SEQ.bit_length() - 1  # log2(SEQ)


def _layernorm(x, g, b):
    # x: (R, E); g, b: (1, E)
    mu = jnp.mean(x, axis=-1, keepdims=True)
    xc = x - mu
    var = jnp.mean(xc * xc, axis=-1, keepdims=True)
    return xc * jax.lax.rsqrt(var + EPS) * g + b


def block_kernel(x_ref, wmat_ref, prw_ref, vec_ref, o_ref):
    E, H, D = EMBED_DIM, NUM_HEADS, HEAD_DIM

    x = x_ref[...]                      # (B*S, E) -- whole problem, one shot
    BS = x.shape[0]

    # ---- unpack the packed per-feature vectors (static lane slices) ----
    ln1_g = vec_ref[0:1, 0:E]
    ln1_b = vec_ref[0:1, E:2 * E]
    ln2_g = vec_ref[0:1, 2 * E:3 * E]
    ln2_b = vec_ref[0:1, 3 * E:4 * E]
    b_qkv = vec_ref[1:2, 0:3 * E]       # folded qkv bias (query part pre-scaled)
    bo    = vec_ref[1:2, 3 * E:4 * E]   # attn.out_proj bias
    fc_b  = vec_ref[2:3, :]             # c_fc bias (1, 4E)
    pr_b  = vec_ref[3:4, 0:E]           # c_proj bias

    # ---- x = ln_1(x) ----
    h = _layernorm(x, ln1_g, ln1_b)

    # ---- folded (qw/kw/vw ∘ attn.in_proj) projection: ONE matmul for q,k,v ----
    qkv = jnp.dot(h, wmat_ref[:, 0:3 * E],
                  preferred_element_type=jnp.float32) + b_qkv        # (BS, 3E)

    # ---- block-diagonal batch mask so all B sequences share one score matmul ----
    r = jax.lax.broadcasted_iota(jnp.int32, (BS, BS), 0)
    c = jax.lax.broadcasted_iota(jnp.int32, (BS, BS), 1)
    same_batch = (r >> _SEQ_SHIFT) == (c >> _SEQ_SHIFT)

    wo = wmat_ref[:, 3 * E:4 * E]       # attn.out_proj weight, (E, E)

    # ---- per-head attention over all batches at once; out_proj folded in ----
    acc = jnp.zeros((BS, E), jnp.float32)
    for hd in range(H):
        lo = hd * D
        qh = qkv[:, lo:lo + D]                      # pre-scaled by 1/sqrt(D)
        kh = qkv[:, E + lo:E + lo + D]
        vh = qkv[:, 2 * E + lo:2 * E + lo + D]
        # q @ k^T without an explicit transpose: contract last dims of both.
        s = jax.lax.dot_general(qh, kh, (((1,), (1,)), ((), ())),
                                preferred_element_type=jnp.float32)  # (BS, BS)
        s = jnp.where(same_batch, s, -1e30)          # mask cross-batch keys
        s = s - jnp.max(s, axis=-1, keepdims=True)
        p = jnp.exp(s)
        p = p * pl.reciprocal(jnp.sum(p, axis=-1, keepdims=True), approx=True)
        oh = jnp.dot(p, vh, preferred_element_type=jnp.float32)      # (BS, D)
        # concat_h(oh) @ Wo == sum_h oh @ Wo[h*D:(h+1)*D, :]  (no concatenate)
        acc = acc + jnp.dot(oh, wo[lo:lo + D, :],
                            preferred_element_type=jnp.float32)      # (BS, E)

    # x = x + attn(...)   (residual on the ln_1 output, per the module)
    x1 = h + acc + bo

    # ---- x = ln_2(x) ----
    h2 = _layernorm(x1, ln2_g, ln2_b)

    # ---- MLP: c_proj(gelu(c_fc(x))), exact erf GELU ----
    fc = jnp.dot(h2, wmat_ref[:, 4 * E:8 * E],
                 preferred_element_type=jnp.float32) + fc_b          # (BS, 4E)
    g = 0.5 * fc * (1.0 + jax.lax.erf(fc * (1.0 / math.sqrt(2.0))))
    pr = jnp.dot(g, prw_ref[...],
                 preferred_element_type=jnp.float32) + pr_b          # (BS, E)

    # dropout(p=0) is identity; residual on the ln_2 output, per the module
    o_ref[...] = h2 + pr


def _pack_params(params):
    """Fold stacked linears and pack everything into 3 dense buffers."""
    E = EMBED_DIM
    scale = 1.0 / math.sqrt(HEAD_DIM)

    # Two stacked linears with no nonlinearity == one linear.
    # Fold the 1/sqrt(head_dim) query scaling in as well.
    w_q = (params["qw_w"] @ params["wq"]) * scale
    w_k = params["kw_w"] @ params["wk"]
    w_v = params["vw_w"] @ params["wv"]
    b_q = (params["qw_b"] @ params["wq"] + params["bq"]) * scale
    b_k = params["kw_b"] @ params["wk"] + params["bk"]
    b_v = params["vw_b"] @ params["wv"] + params["bv"]
    w_qkv = jnp.concatenate([w_q, w_k, w_v], axis=1)      # (E, 3E)
    b_qkv = jnp.concatenate([b_q, b_k, b_v], axis=1)      # (1, 3E)

    # One lane-dense (E, 8E) = (32, 256) weight slab: [W_qkv | W_out | W_fc]
    wmat = jnp.concatenate([w_qkv, params["wo"], params["fc_w"]], axis=1)

    # One (4, 4E) = (4, 128) slab for every per-feature vector.
    vec = jnp.concatenate([
        jnp.concatenate([params["ln1_g"], params["ln1_b"],
                         params["ln2_g"], params["ln2_b"]], axis=1),
        jnp.concatenate([b_qkv, params["bo"]], axis=1),
        params["fc_b"],
        jnp.concatenate([params["pr_b"],
                         jnp.zeros((1, 3 * E), jnp.float32)], axis=1),
    ], axis=0)

    return wmat, params["pr_w"], vec


@jax.jit
def block_forward(x, params):
    B, S, E = x.shape
    wmat, pr_w, vec = _pack_params(params)
    x2d = x.reshape(B * S, E)   # contiguous reshape: free in HBM

    out2d = pl.pallas_call(
        block_kernel,
        out_shape=jax.ShapeDtypeStruct((B * S, E), jnp.float32),
    )(x2d, wmat, pr_w, vec)

    return out2d.reshape(B, S, E)


def init_params(key, E=EMBED_DIM):
    H4 = 4 * E
    keys = jax.random.split(key, 9)

    def lin(k, fan_in, fan_out):
        # PyTorch-style uniform(-1/sqrt(fan_in), 1/sqrt(fan_in)) init,
        # stored already transposed as (fan_in, fan_out).
        bound = 1.0 / math.sqrt(fan_in)
        kw_, kb_ = jax.random.split(k)
        w = jax.random.uniform(kw_, (fan_in, fan_out), jnp.float32, -bound, bound)
        b = jax.random.uniform(kb_, (1, fan_out), jnp.float32, -bound, bound)
        return w, b

    p = {}
    p["ln1_g"] = jnp.ones((1, E), jnp.float32)
    p["ln1_b"] = jnp.zeros((1, E), jnp.float32)
    p["qw_w"], p["qw_b"] = lin(keys[0], E, E)
    p["kw_w"], p["kw_b"] = lin(keys[1], E, E)
    p["vw_w"], p["vw_b"] = lin(keys[2], E, E)
    # attn.in_proj_weight (3E, E) split into q/k/v pieces (stored transposed):
    p["wq"], p["bq"] = lin(keys[3], E, E)
    p["wk"], p["bk"] = lin(keys[4], E, E)
    p["wv"], p["bv"] = lin(keys[5], E, E)
    # attn.out_proj
    p["wo"], p["bo"] = lin(keys[6], E, E)
    p["ln2_g"] = jnp.ones((1, E), jnp.float32)
    p["ln2_b"] = jnp.zeros((1, E), jnp.float32)
    p["fc_w"], p["fc_b"] = lin(keys[7], E, H4)
    p["pr_w"], p["pr_b"] = lin(keys[8], H4, E)
    return p


def block_ref(x, p):
    """Pure-JAX reference with the original (unfolded) semantics."""
    def ln(y, g, b):
        mu = y.mean(-1, keepdims=True)
        var = ((y - mu) ** 2).mean(-1, keepdims=True)
        return (y - mu) / jnp.sqrt(var + EPS) * g[0] + b[0]

    B, S, E = x.shape
    h = ln(x, p["ln1_g"], p["ln1_b"])
    q = h @ p["qw_w"] + p["qw_b"][0]
    k = h @ p["kw_w"] + p["kw_b"][0]
    v = h @ p["vw_w"] + p["vw_b"][0]
    qp = q @ p["wq"] + p["bq"][0]
    kp = k @ p["wk"] + p["bk"][0]
    vp = v @ p["wv"] + p["bv"][0]

    def split(a):
        return a.reshape(B, S, NUM_HEADS, HEAD_DIM).transpose(0, 2, 1, 3)

    qh, kh, vh = split(qp), split(kp), split(vp)
    s = jnp.einsum("bhqd,bhkd->bhqk", qh, kh) / math.sqrt(HEAD_DIM)
    patt = jax.nn.softmax(s, axis=-1)
    oh = jnp.einsum("bhqk,bhkd->bhqd", patt, vh)
    attn = oh.transpose(0, 2, 1, 3).reshape(B, S, E)
    attn = attn @ p["wo"] + p["bo"][0]
    x1 = h + attn
    h2 = ln(x1, p["ln2_g"], p["ln2_b"])
    fc = h2 @ p["fc_w"] + p["fc_b"][0]
    g = 0.5 * fc * (1.0 + jax.lax.erf(fc / math.sqrt(2.0)))
    pr = g @ p["pr_w"] + p["pr_b"][0]
    return h2 + pr


if __name__ == "__main__":
    key = jax.random.PRNGKey(0)
    kx, kp = jax.random.split(key)
    x = jax.random.normal(kx, (BATCH, SEQ, EMBED_DIM), jnp.float32)
    params = init_params(kp)

    out = jax.block_until_ready(block_forward(x, params))
    ref = jax.block_until_ready(block_ref(x, params))

    assert out.shape == (BATCH, SEQ, EMBED_DIM)
    # tolerance accounts for approx-reciprocal softmax + weight-folding reassociation
    assert jnp.allclose(out, ref, atol=1e-3, rtol=1e-3), (
        float(jnp.max(jnp.abs(out - ref))))

    print("KERNEL_OK")
</pallas_src>

<mosaic_0001>
module attributes {stable_mosaic.version = 11 : i64} {
  func.func @block_kernel(%arg0: memref<16x32xf32, #tpu.memory_space<vmem>>, %arg1: memref<32x256xf32, #tpu.memory_space<vmem>>, %arg2: memref<128x32xf32, #tpu.memory_space<vmem>>, %arg3: memref<4x128xf32, #tpu.memory_space<vmem>>, %arg4: memref<16x32xf32, #tpu.memory_space<vmem>>) attributes {dimension_semantics = [], scalar_prefetch = 0 : i64, scratch_operands = 0 : i64, tpu.core_type = #tpu.core_type<tc>} {
    %c0 = arith.constant 0 : index
    %c0_0 = arith.constant 0 : index
    %0 = vector.load %arg0[%c0, %c0_0] : memref<16x32xf32, #tpu.memory_space<vmem>>, vector<16x32xf32>
    %c0_1 = arith.constant 0 : index
    %c0_2 = arith.constant 0 : index
    %1 = vector.load %arg3[%c0_1, %c0_2] : memref<4x128xf32, #tpu.memory_space<vmem>>, vector<1x32xf32>
    %c0_3 = arith.constant 0 : index
    %c32 = arith.constant 32 : index
    %2 = vector.load %arg3[%c0_3, %c32] : memref<4x128xf32, #tpu.memory_space<vmem>>, vector<1x32xf32>
    %c0_4 = arith.constant 0 : index
    %c64 = arith.constant 64 : index
    %3 = vector.load %arg3[%c0_4, %c64] : memref<4x128xf32, #tpu.memory_space<vmem>>, vector<1x32xf32>
    %c0_5 = arith.constant 0 : index
    %c96 = arith.constant 96 : index
    %4 = vector.load %arg3[%c0_5, %c96] : memref<4x128xf32, #tpu.memory_space<vmem>>, vector<1x32xf32>
    %c1 = arith.constant 1 : index
    %c0_6 = arith.constant 0 : index
    %5 = vector.load %arg3[%c1, %c0_6] : memref<4x128xf32, #tpu.memory_space<vmem>>, vector<1x96xf32>
    %c1_7 = arith.constant 1 : index
    %c96_8 = arith.constant 96 : index
    %6 = vector.load %arg3[%c1_7, %c96_8] : memref<4x128xf32, #tpu.memory_space<vmem>>, vector<1x32xf32>
    %c2 = arith.constant 2 : index
    %c0_9 = arith.constant 0 : index
    %7 = vector.load %arg3[%c2, %c0_9] : memref<4x128xf32, #tpu.memory_space<vmem>>, vector<1x128xf32>
    %c3 = arith.constant 3 : index
    %c0_10 = arith.constant 0 : index
    %8 = vector.load %arg3[%c3, %c0_10] : memref<4x128xf32, #tpu.memory_space<vmem>>, vector<1x32xf32>
    %cst = arith.constant dense<0.000000e+00> : vector<16xf32>
    %9 = vector.multi_reduction <add>, %0, %cst [1] : vector<16x32xf32> to vector<16xf32>
    %10 = vector.shape_cast %9 : vector<16xf32> to vector<16x1xf32>
    %cst_11 = arith.constant 3.200000e+01 : f32
    %11 = vector.broadcast %cst_11 : f32 to vector<16x1xf32>
    %12 = arith.divf %10, %11 : vector<16x1xf32>
    %13 = vector.broadcast %12 : vector<16x1xf32> to vector<16x32xf32>
    %14 = arith.subf %0, %13 : vector<16x32xf32>
    %15 = arith.mulf %14, %14 : vector<16x32xf32>
    %cst_12 = arith.constant dense<0.000000e+00> : vector<16xf32>
    %16 = vector.multi_reduction <add>, %15, %cst_12 [1] : vector<16x32xf32> to vector<16xf32>
    %17 = vector.shape_cast %16 : vector<16xf32> to vector<16x1xf32>
    %cst_13 = arith.constant 3.200000e+01 : f32
    %18 = vector.broadcast %cst_13 : f32 to vector<16x1xf32>
    %19 = arith.divf %17, %18 : vector<16x1xf32>
    %cst_14 = arith.constant 9.99999974E-6 : f32
    %20 = vector.broadcast %cst_14 : f32 to vector<16x1xf32>
    %21 = arith.addf %19, %20 : vector<16x1xf32>
    %22 = math.rsqrt %21 : vector<16x1xf32>
    %23 = vector.broadcast %22 : vector<16x1xf32> to vector<16x32xf32>
    %24 = arith.mulf %14, %23 : vector<16x32xf32>
    %25 = vector.broadcast %1 : vector<1x32xf32> to vector<16x32xf32>
    %26 = arith.mulf %24, %25 : vector<16x32xf32>
    %27 = vector.broadcast %2 : vector<1x32xf32> to vector<16x32xf32>
    %28 = arith.addf %26, %27 : vector<16x32xf32>
    %c0_15 = arith.constant 0 : index
    %c0_16 = arith.constant 0 : index
    %29 = vector.load %arg1[%c0_15, %c0_16] : memref<32x256xf32, #tpu.memory_space<vmem>>, vector<32x96xf32>
    %cst_17 = arith.constant dense<0.000000e+00> : vector<16x96xf32>
    %30 = tpu.matmul %28, %29, %cst_17 {dimension_numbers = #tpu.dot_dimension_numbers<[1], [0], [0], [1], [0, 0, 1, 1], [], []>} : vector<16x32xf32>, vector<32x96xf32>, vector<16x96xf32> -> vector<16x96xf32>
    %31 = vector.broadcast %5 : vector<1x96xf32> to vector<16x96xf32>
    %32 = arith.addf %30, %31 : vector<16x96xf32>
    %33 = tpu.iota {dimensions = array<i32: 0>} : vector<16x16xi32>
    %34 = tpu.iota {dimensions = array<i32: 1>} : vector<16x16xi32>
    %c3_i32 = arith.constant 3 : i32
    %35 = vector.broadcast %c3_i32 : i32 to vector<16x16xi32>
    %36 = arith.shrsi %33, %35 : vector<16x16xi32>
    %c3_i32_18 = arith.constant 3 : i32
    %37 = vector.broadcast %c3_i32_18 : i32 to vector<16x16xi32>
    %38 = arith.shrsi %34, %37 : vector<16x16xi32>
    %39 = arith.cmpi eq, %36, %38 : vector<16x16xi32>
    %c0_19 = arith.constant 0 : index
    %c96_20 = arith.constant 96 : index
    %40 = vector.load %arg1[%c0_19, %c96_20] : memref<32x256xf32, #tpu.memory_space<vmem>>, vector<32x32xf32>
    %cst_21 = arith.constant 0.000000e+00 : f32
    %41 = vector.broadcast %cst_21 : f32 to vector<16x32xf32>
    %42 = vector.extract_strided_slice %32 {offsets = [0, 0], sizes = [16, 8], strides = [1, 1]} : vector<16x96xf32> to vector<16x8xf32>
    %43 = vector.extract_strided_slice %32 {offsets = [0, 32], sizes = [16, 8], strides = [1, 1]} : vector<16x96xf32> to vector<16x8xf32>
    %44 = vector.extract_strided_slice %32 {offsets = [0, 64], sizes = [16, 8], strides = [1, 1]} : vector<16x96xf32> to vector<16x8xf32>
    %cst_22 = arith.constant dense<0.000000e+00> : vector<16x16xf32>
    %45 = tpu.matmul %42, %43, %cst_22 {dimension_numbers = #tpu.dot_dimension_numbers<[1], [1], [0], [0], [0, 0, 1, 0], [], []>} : vector<16x8xf32>, vector<16x8xf32>, vector<16x16xf32> -> vector<16x16xf32>
    %cst_23 = arith.constant -1.000000e+30 : f32
    %46 = vector.broadcast %cst_23 : f32 to vector<16x16xf32>
    %47 = arith.select %39, %45, %46 : vector<16x16xi1>, vector<16x16xf32>
    %cst_24 = arith.constant dense<0xFF800000> : vector<16xf32>
    %48 = vector.multi_reduction <maximumf>, %47, %cst_24 [1] : vector<16x16xf32> to vector<16xf32>
    %49 = vector.shape_cast %48 : vector<16xf32> to vector<16x1xf32>
    %50 = vector.broadcast %49 : vector<16x1xf32> to vector<16x16xf32>
    %51 = arith.subf %47, %50 : vector<16x16xf32>
    %52 = math.exp %51 : vector<16x16xf32>
    %cst_25 = arith.constant dense<0.000000e+00> : vector<16xf32>
    %53 = vector.multi_reduction <add>, %52, %cst_25 [1] : vector<16x16xf32> to vector<16xf32>
    %54 = vector.shape_cast %53 : vector<16xf32> to vector<16x1xf32>
    %55 = tpu.reciprocal %54 {approx = true} : vector<16x1xf32> -> vector<16x1xf32>
    %56 = vector.broadcast %55 : vector<16x1xf32> to vector<16x16xf32>
    %57 = arith.mulf %52, %56 : vector<16x16xf32>
    %cst_26 = arith.constant dense<0.000000e+00> : vector<16x8xf32>
    %58 = tpu.matmul %57, %44, %cst_26 {dimension_numbers = #tpu.dot_dimension_numbers<[1], [0], [0], [1], [0, 0, 1, 1], [], []>} : vector<16x16xf32>, vector<16x8xf32>, vector<16x8xf32> -> vector<16x8xf32>
    %59 = vector.extract_strided_slice %40 {offsets = [0, 0], sizes = [8, 32], strides = [1, 1]} : vector<32x32xf32> to vector<8x32xf32>
    %cst_27 = arith.constant dense<0.000000e+00> : vector<16x32xf32>
    %60 = tpu.matmul %58, %59, %cst_27 {dimension_numbers = #tpu.dot_dimension_numbers<[1], [0], [0], [1], [0, 0, 1, 1], [], []>} : vector<16x8xf32>, vector<8x32xf32>, vector<16x32xf32> -> vector<16x32xf32>
    %61 = arith.addf %41, %60 : vector<16x32xf32>
    %62 = vector.extract_strided_slice %32 {offsets = [0, 8], sizes = [16, 8], strides = [1, 1]} : vector<16x96xf32> to vector<16x8xf32>
    %63 = vector.extract_strided_slice %32 {offsets = [0, 40], sizes = [16, 8], strides = [1, 1]} : vector<16x96xf32> to vector<16x8xf32>
    %64 = vector.extract_strided_slice %32 {offsets = [0, 72], sizes = [16, 8], strides = [1, 1]} : vector<16x96xf32> to vector<16x8xf32>
    %cst_28 = arith.constant dense<0.000000e+00> : vector<16x16xf32>
    %65 = tpu.matmul %62, %63, %cst_28 {dimension_numbers = #tpu.dot_dimension_numbers<[1], [1], [0], [0], [0, 0, 1, 0], [], []>} : vector<16x8xf32>, vector<16x8xf32>, vector<16x16xf32> -> vector<16x16xf32>
    %cst_29 = arith.constant -1.000000e+30 : f32
    %66 = vector.broadcast %cst_29 : f32 to vector<16x16xf32>
    %67 = arith.select %39, %65, %66 : vector<16x16xi1>, vector<16x16xf32>
    %cst_30 = arith.constant dense<0xFF800000> : vector<16xf32>
    %68 = vector.multi_reduction <maximumf>, %67, %cst_30 [1] : vector<16x16xf32> to vector<16xf32>
    %69 = vector.shape_cast %68 : vector<16xf32> to vector<16x1xf32>
    %70 = vector.broadcast %69 : vector<16x1xf32> to vector<16x16xf32>
    %71 = arith.subf %67, %70 : vector<16x16xf32>
    %72 = math.exp %71 : vector<16x16xf32>
    %cst_31 = arith.constant dense<0.000000e+00> : vector<16xf32>
    %73 = vector.multi_reduction <add>, %72, %cst_31 [1] : vector<16x16xf32> to vector<16xf32>
    %74 = vector.shape_cast %73 : vector<16xf32> to vector<16x1xf32>
    %75 = tpu.reciprocal %74 {approx = true} : vector<16x1xf32> -> vector<16x1xf32>
    %76 = vector.broadcast %75 : vector<16x1xf32> to vector<16x16xf32>
    %77 = arith.mulf %72, %76 : vector<16x16xf32>
    %cst_32 = arith.constant dense<0.000000e+00> : vector<16x8xf32>
    %78 = tpu.matmul %77, %64, %cst_32 {dimension_numbers = #tpu.dot_dimension_numbers<[1], [0], [0], [1], [0, 0, 1, 1], [], []>} : vector<16x16xf32>, vector<16x8xf32>, vector<16x8xf32> -> vector<16x8xf32>
    %79 = vector.extract_strided_slice %40 {offsets = [8, 0], sizes = [8, 32], strides = [1, 1]} : vector<32x32xf32> to vector<8x32xf32>
    %cst_33 = arith.constant dense<0.000000e+00> : vector<16x32xf32>
    %80 = tpu.matmul %78, %79, %cst_33 {dimension_numbers = #tpu.dot_dimension_numbers<[1], [0], [0], [1], [0, 0, 1, 1], [], []>} : vector<16x8xf32>, vector<8x32xf32>, vector<16x32xf32> -> vector<16x32xf32>
    %81 = arith.addf %61, %80 : vector<16x32xf32>
    %82 = vector.extract_strided_slice %32 {offsets = [0, 16], sizes = [16, 8], strides = [1, 1]} : vector<16x96xf32> to vector<16x8xf32>
    %83 = vector.extract_strided_slice %32 {offsets = [0, 48], sizes = [16, 8], strides = [1, 1]} : vector<16x96xf32> to vector<16x8xf32>
    %84 = vector.extract_strided_slice %32 {offsets = [0, 80], sizes = [16, 8], strides = [1, 1]} : vector<16x96xf32> to vector<16x8xf32>
    %cst_34 = arith.constant dense<0.000000e+00> : vector<16x16xf32>
    %85 = tpu.matmul %82, %83, %cst_34 {dimension_numbers = #tpu.dot_dimension_numbers<[1], [1], [0], [0], [0, 0, 1, 0], [], []>} : vector<16x8xf32>, vector<16x8xf32>, vector<16x16xf32> -> vector<16x16xf32>
    %cst_35 = arith.constant -1.000000e+30 : f32
    %86 = vector.broadcast %cst_35 : f32 to vector<16x16xf32>
    %87 = arith.select %39, %85, %86 : vector<16x16xi1>, vector<16x16xf32>
    %cst_36 = arith.constant dense<0xFF800000> : vector<16xf32>
    %88 = vector.multi_reduction <maximumf>, %87, %cst_36 [1] : vector<16x16xf32> to vector<16xf32>
    %89 = vector.shape_cast %88 : vector<16xf32> to vector<16x1xf32>
    %90 = vector.broadcast %89 : vector<16x1xf32> to vector<16x16xf32>
    %91 = arith.subf %87, %90 : vector<16x16xf32>
    %92 = math.exp %91 : vector<16x16xf32>
    %cst_37 = arith.constant dense<0.000000e+00> : vector<16xf32>
    %93 = vector.multi_reduction <add>, %92, %cst_37 [1] : vector<16x16xf32> to vector<16xf32>
    %94 = vector.shape_cast %93 : vector<16xf32> to vector<16x1xf32>
    %95 = tpu.reciprocal %94 {approx = true} : vector<16x1xf32> -> vector<16x1xf32>
    %96 = vector.broadcast %95 : vector<16x1xf32> to vector<16x16xf32>
    %97 = arith.mulf %92, %96 : vector<16x16xf32>
    %cst_38 = arith.constant dense<0.000000e+00> : vector<16x8xf32>
    %98 = tpu.matmul %97, %84, %cst_38 {dimension_numbers = #tpu.dot_dimension_numbers<[1], [0], [0], [1], [0, 0, 1, 1], [], []>} : vector<16x16xf32>, vector<16x8xf32>, vector<16x8xf32> -> vector<16x8xf32>
    %99 = vector.extract_strided_slice %40 {offsets = [16, 0], sizes = [8, 32], strides = [1, 1]} : vector<32x32xf32> to vector<8x32xf32>
    %cst_39 = arith.constant dense<0.000000e+00> : vector<16x32xf32>
    %100 = tpu.matmul %98, %99, %cst_39 {dimension_numbers = #tpu.dot_dimension_numbers<[1], [0], [0], [1], [0, 0, 1, 1], [], []>} : vector<16x8xf32>, vector<8x32xf32>, vector<16x32xf32> -> vector<16x32xf32>
    %101 = arith.addf %81, %100 : vector<16x32xf32>
    %102 = vector.extract_strided_slice %32 {offsets = [0, 24], sizes = [16, 8], strides = [1, 1]} : vector<16x96xf32> to vector<16x8xf32>
    %103 = vector.extract_strided_slice %32 {offsets = [0, 56], sizes = [16, 8], strides = [1, 1]} : vector<16x96xf32> to vector<16x8xf32>
    %104 = vector.extract_strided_slice %32 {offsets = [0, 88], sizes = [16, 8], strides = [1, 1]} : vector<16x96xf32> to vector<16x8xf32>
    %cst_40 = arith.constant dense<0.000000e+00> : vector<16x16xf32>
    %105 = tpu.matmul %102, %103, %cst_40 {dimension_numbers = #tpu.dot_dimension_numbers<[1], [1], [0], [0], [0, 0, 1, 0], [], []>} : vector<16x8xf32>, vector<16x8xf32>, vector<16x16xf32> -> vector<16x16xf32>
    %cst_41 = arith.constant -1.000000e+30 : f32
    %106 = vector.broadcast %cst_41 : f32 to vector<16x16xf32>
    %107 = arith.select %39, %105, %106 : vector<16x16xi1>, vector<16x16xf32>
    %cst_42 = arith.constant dense<0xFF800000> : vector<16xf32>
    %108 = vector.multi_reduction <maximumf>, %107, %cst_42 [1] : vector<16x16xf32> to vector<16xf32>
    %109 = vector.shape_cast %108 : vector<16xf32> to vector<16x1xf32>
    %110 = vector.broadcast %109 : vector<16x1xf32> to vector<16x16xf32>
    %111 = arith.subf %107, %110 : vector<16x16xf32>
    %112 = math.exp %111 : vector<16x16xf32>
    %cst_43 = arith.constant dense<0.000000e+00> : vector<16xf32>
    %113 = vector.multi_reduction <add>, %112, %cst_43 [1] : vector<16x16xf32> to vector<16xf32>
    %114 = vector.shape_cast %113 : vector<16xf32> to vector<16x1xf32>
    %115 = tpu.reciprocal %114 {approx = true} : vector<16x1xf32> -> vector<16x1xf32>
    %116 = vector.broadcast %115 : vector<16x1xf32> to vector<16x16xf32>
    %117 = arith.mulf %112, %116 : vector<16x16xf32>
    %cst_44 = arith.constant dense<0.000000e+00> : vector<16x8xf32>
    %118 = tpu.matmul %117, %104, %cst_44 {dimension_numbers = #tpu.dot_dimension_numbers<[1], [0], [0], [1], [0, 0, 1, 1], [], []>} : vector<16x16xf32>, vector<16x8xf32>, vector<16x8xf32> -> vector<16x8xf32>
    %119 = vector.extract_strided_slice %40 {offsets = [24, 0], sizes = [8, 32], strides = [1, 1]} : vector<32x32xf32> to vector<8x32xf32>
    %cst_45 = arith.constant dense<0.000000e+00> : vector<16x32xf32>
    %120 = tpu.matmul %118, %119, %cst_45 {dimension_numbers = #tpu.dot_dimension_numbers<[1], [0], [0], [1], [0, 0, 1, 1], [], []>} : vector<16x8xf32>, vector<8x32xf32>, vector<16x32xf32> -> vector<16x32xf32>
    %121 = arith.addf %101, %120 : vector<16x32xf32>
    %122 = arith.addf %28, %121 : vector<16x32xf32>
    %123 = vector.broadcast %6 : vector<1x32xf32> to vector<16x32xf32>
    %124 = arith.addf %122, %123 : vector<16x32xf32>
    %cst_46 = arith.constant dense<0.000000e+00> : vector<16xf32>
    %125 = vector.multi_reduction <add>, %124, %cst_46 [1] : vector<16x32xf32> to vector<16xf32>
    %126 = vector.shape_cast %125 : vector<16xf32> to vector<16x1xf32>
    %cst_47 = arith.constant 3.200000e+01 : f32
    %127 = vector.broadcast %cst_47 : f32 to vector<16x1xf32>
    %128 = arith.divf %126, %127 : vector<16x1xf32>
    %129 = vector.broadcast %128 : vector<16x1xf32> to vector<16x32xf32>
    %130 = arith.subf %124, %129 : vector<16x32xf32>
    %131 = arith.mulf %130, %130 : vector<16x32xf32>
    %cst_48 = arith.constant dense<0.000000e+00> : vector<16xf32>
    %132 = vector.multi_reduction <add>, %131, %cst_48 [1] : vector<16x32xf32> to vector<16xf32>
    %133 = vector.shape_cast %132 : vector<16xf32> to vector<16x1xf32>
    %cst_49 = arith.constant 3.200000e+01 : f32
    %134 = vector.broadcast %cst_49 : f32 to vector<16x1xf32>
    %135 = arith.divf %133, %134 : vector<16x1xf32>
    %cst_50 = arith.constant 9.99999974E-6 : f32
    %136 = vector.broadcast %cst_50 : f32 to vector<16x1xf32>
    %137 = arith.addf %135, %136 : vector<16x1xf32>
    %138 = math.rsqrt %137 : vector<16x1xf32>
    %139 = vector.broadcast %138 : vector<16x1xf32> to vector<16x32xf32>
    %140 = arith.mulf %130, %139 : vector<16x32xf32>
    %141 = vector.broadcast %3 : vector<1x32xf32> to vector<16x32xf32>
    %142 = arith.mulf %140, %141 : vector<16x32xf32>
    %143 = vector.broadcast %4 : vector<1x32xf32> to vector<16x32xf32>
    %144 = arith.addf %142, %143 : vector<16x32xf32>
    %c0_51 = arith.constant 0 : index
    %c128 = arith.constant 128 : index
    %145 = vector.load %arg1[%c0_51, %c128] : memref<32x256xf32, #tpu.memory_space<vmem>>, vector<32x128xf32>
    %cst_52 = arith.constant dense<0.000000e+00> : vector<16x128xf32>
    %146 = tpu.matmul %144, %145, %cst_52 {dimension_numbers = #tpu.dot_dimension_numbers<[1], [0], [0], [1], [0, 0, 1, 1], [], []>} : vector<16x32xf32>, vector<32x128xf32>, vector<16x128xf32> -> vector<16x128xf32>
    %147 = vector.broadcast %7 : vector<1x128xf32> to vector<16x128xf32>
    %148 = arith.addf %146, %147 : vector<16x128xf32>
    %cst_53 = arith.constant 5.000000e-01 : f32
    %149 = vector.broadcast %cst_53 : f32 to vector<16x128xf32>
    %150 = arith.mulf %149, %148 : vector<16x128xf32>
    %cst_54 = arith.constant 0.707106769 : f32
    %151 = vector.broadcast %cst_54 : f32 to vector<16x128xf32>
    %152 = arith.mulf %148, %151 : vector<16x128xf32>
    %153 = math.erf %152 : vector<16x128xf32>
    %cst_55 = arith.constant 1.000000e+00 : f32
    %154 = vector.broadcast %cst_55 : f32 to vector<16x128xf32>
    %155 = arith.addf %154, %153 : vector<16x128xf32>
    %156 = arith.mulf %150, %155 : vector<16x128xf32>
    %c0_56 = arith.constant 0 : index
    %c0_57 = arith.constant 0 : index
    %157 = vector.load %arg2[%c0_56, %c0_57] : memref<128x32xf32, #tpu.memory_space<vmem>>, vector<128x32xf32>
    %cst_58 = arith.constant dense<0.000000e+00> : vector<16x32xf32>
    %158 = tpu.matmul %156, %157, %cst_58 {dimension_numbers = #tpu.dot_dimension_numbers<[1], [0], [0], [1], [0, 0, 1, 1], [], []>} : vector<16x128xf32>, vector<128x32xf32>, vector<16x32xf32> -> vector<16x32xf32>
    %159 = vector.broadcast %8 : vector<1x32xf32> to vector<16x32xf32>
    %160 = arith.addf %158, %159 : vector<16x32xf32>
    %161 = arith.addf %144, %160 : vector<16x32xf32>
    %c0_59 = arith.constant 0 : index
    %c0_60 = arith.constant 0 : index
    %162 = vector.load %arg4[%c0_59, %c0_60] : memref<16x32xf32, #tpu.memory_space<vmem>>, vector<16x32xf32>
    tpu.vector_store %arg4[%c0_59, %c0_60], %161 {strides = array<i32>} : memref<16x32xf32, #tpu.memory_space<vmem>>, vector<16x32xf32>,
    return
  }
}

</mosaic_0001>

<llo_original>
// kernel: block_forward.1
$region0: #{block_forward.1}
  #allocation0 [shape = 'u32[]', space=smem, size = 0x4, offset = 0x4, fixed_abs, tag = 'smem constant byte address 0x4 - core index']
  #allocation1 [shape = 'u32[144,128]{1,0:T(1,128)}', space=vmem, size = 0x12000, scoped, tag = 'internal scratch']
  %s0 = inlined_call_operand.vmem [shape: f32[16,32], index: 0, kind: input, shape index: {}]
  %s1 = inlined_call_operand.vmem [shape: f32[32,256], index: 1, kind: input, shape index: {}]
  %s2 = inlined_call_operand.vmem [shape: f32[128,32], index: 2, kind: input, shape index: {}]
  %s3 = inlined_call_operand.vmem [shape: f32[4,128], index: 3, kind: input, shape index: {}]
  %s4 = inlined_call_operand.hbm [shape: f32[16,32], index: 4, kind: output, shape index: {}]
  %s5 = sld [smem:[#allocation0]]
  $region26: #{block_forward.1} parent=0
    _
  %s7 = ssub.s32 1, %s5
  %s8 = scalar_select 0, %s7, %s5
  $region1: #{block_forward.1} parent=0
    #allocation2 [shape = 'u8[8192]{0}', space=vmem, size = 0x2000, scoped, tag = 'output window, operand 0, single buffered']
    #allocation3 [shape = 's32[1]{0}', space=sflag, size = 0x4, scoped, tag = 'scoped memory for block_forward.1']
    %9 = vsyncpa [#allocation3], 0
    // Predicated region
    $region2: #{block_forward.1} parent=1 // pred_check
      _
    $region3: #{block_forward.1} parent=1 // pred_check_branch
      %11 = sbr.rel (0) target = $region5
    $region4: #{block_forward.1} parent=1 // pred_region
      _
    $region5: #{block_forward.1} parent=1 // pred_fallthru
      _
    // Predicated region
    $region6: #{block_forward.1} parent=1 // pred_check
      _
    $region7: #{block_forward.1} parent=1 // pred_check_branch
      %13 = sbr.rel (0) target = $region9
    $region8: #{block_forward.1} parent=1 // pred_region
      _
    $region9: #{block_forward.1} parent=1 // pred_fallthru
      _
    // Predicated region
    $region10: #{block_forward.1} parent=1 // pred_check
      _
    $region11: #{block_forward.1} parent=1 // pred_check_branch
      %15 = sbr.rel (0) target = $region13
    $region12: #{block_forward.1} parent=1 // pred_region
      _
    $region13: #{block_forward.1} parent=1 // pred_fallthru
      _
    // Predicated region
    $region14: #{block_forward.1} parent=1 // pred_check
      _
    $region15: #{block_forward.1} parent=1 // pred_check_branch
      %17 = sbr.rel (0) target = $region17
    $region16: #{block_forward.1} parent=1 // pred_region
      _
    $region17: #{block_forward.1} parent=1 // pred_fallthru
      _
    %v18 = vld [vmem:[%s0] sm:$0xff]
    %v19 = vld [vmem:[%s0 + $0x8] sm:$0xff]
    %v20 = vld [vmem:[%s3] sm:$0x1]
    %v21 = vld [vmem:[%s3 + $0x1] sm:$0x1]
    %v22 = vld [vmem:[%s3 + $0x2] sm:$0x1]
    %v23 = vld [vmem:[%s3 + $0x3] sm:$0x1]
    %vm24 = vcmask 261120
    %v25 = vsel %vm24, %v18, 0.0
    %26 = vadd.xlane.f32.xlu0 %v25
    %v27 = vpop.xlane.xlu0 %26
    %v28 = vsel %vm24, %v19, 0.0
    %29 = vadd.xlane.f32.xlu0 %v28
    %v30 = vpop.xlane.xlu0 %29
    %v31 = vrcp.pop 32.0
    %v32 = vmul.f32 %v27, %v31
    %v33 = vmul.f32 %v30, %v31
    %v34 = vsub.f32 %v18, %v32
    %v35 = vsub.f32 %v19, %v33
    %v36 = vmul.f32 %v34, %v34
    %v37 = vmul.f32 %v35, %v35
    %v38 = vsel %vm24, %v36, 0.0
    %39 = vadd.xlane.f32.xlu0 %v38
    %v40 = vpop.xlane.xlu0 %39
    %v41 = vsel %vm24, %v37, 0.0
    %42 = vadd.xlane.f32.xlu0 %v41
    %v43 = vpop.xlane.xlu0 %42
    %v44 = vmul.f32 %v40, %v31
    %v45 = vmul.f32 %v43, %v31
    %v46 = vadd.f32 %v44, 1e-05
    %v47 = vadd.f32 %v45, 1e-05
    %v48 = vrsqrt.pop %v46
    %v49 = vrsqrt.pop %v47
    %v50 = vmul.f32 %v34, %v48
    %v51 = vmul.f32 %v35, %v49
    %v52 = vlaneseq
    %v53 = vshrl.u32 %v52, 7
    %v54 = vsub.s32 0, %v53
    %v55 = vrot.slane %v20, %v54
    %v56 = vmul.f32 %v50, %v55
    %v57 = vmul.f32 %v51, %v55
    %59 = vrot.lane.b32.xlu0 %v55, 96
    %v60 = vpop.permute.xlu0 %59
    %v62 = vadd.f32 %v56, %v60
    %v63 = vadd.f32 %v57, %v60
    %v64 = vld [vmem:[%s1] sm:$0xff]
    %v65 = vld [vmem:[%s1 + $0x10] sm:$0xff]
    %v66 = vld [vmem:[%s1 + $0x20] sm:$0xff]
    %v67 = vld [vmem:[%s1 + $0x30] sm:$0xff]
    %v68 = vlaneseq
    %v69 = vshrl.u32 %v68, 7
    %v70 = vsub.s32 0, %v69
    %v71 = vrot.slane %v21, %v70
    %v73 = vsel %vm24, %v62, 0
    %v76 = vsel %vm24, %v63, 0
    %78 = vmatprep.subr.mxu0 0.0
    %79 = vmatpush1.msra.mxu0 %v64
    %80 = vmatprep.subr.mxu0 0.0
    %81 = vmatpush1.msra.mxu0 %v65
    %82 = vmatprep.subr.mxu0 0.0
    %83 = vmatpush1.msra.mxu0 %v66
    %84 = vmatprep.subr.mxu0 0.0
    %85 = vmatpush1.msra.mxu0 %v67
    %86 = vmatprep.subr.mxu0 0.0
    %87 = vmatpush1.msra.mxu0 0.0
    %88 = vmatprep.subr.mxu0 0.0
    %89 = vmatpush1.msra.mxu0 0.0
    %90 = vmatprep.subr.mxu0 0.0
    %91 = vmatpush1.msra.mxu0 0.0
    %92 = vmatprep.subr.mxu0 0.0
    %93 = vmatpush1.msra.mxu0 0.0
    %94 = vmatprep.subr.mxu0 0.0
    %95 = vmatpush1.msra.mxu0 0.0
    %96 = vmatprep.subr.mxu0 0.0
    %97 = vmatpush1.msra.mxu0 0.0
    %98 = vmatprep.subr.mxu0 0.0
    %99 = vmatpush1.msra.mxu0 0.0
    %100 = vmatprep.subr.mxu0 0.0
    %101 = vmatpush1.msra.mxu0 0.0
    %102 = vmatprep.subr.mxu0 0.0
    %103 = vmatpush1.msra.mxu0 0.0
    %104 = vmatprep.subr.mxu0 0.0
    %105 = vmatpush1.msra.mxu0 0.0
    %106 = vmatprep.subr.mxu0 0.0
    %107 = vmatpush1.msra.mxu0 0.0
    %108 = vmatprep.subr.mxu0 0.0
    %109 = vmatpush1.msra.mxu0 0.0
    %110 = vmatprep.subr.mxu0 0.0
    %111 = vmatpush1.msra.mxu0 0.0
    %112 = vmatprep.subr.mxu0 0.0
    %113 = vmatpush1.msra.mxu0 0.0
    %114 = vmatprep.subr.mxu0 0.0
    %115 = vmatpush1.msra.mxu0 0.0
    %116 = vmatprep.subr.mxu0 0.0
    %117 = vmatpush1.msra.mxu0 0.0
    %118 = vmatprep.subr.mxu0 0.0
    %119 = vmatpush1.msra.mxu0 0.0
    %120 = vmatprep.subr.mxu0 0.0
    %121 = vmatpush1.msra.mxu0 0.0
    %122 = vmatprep.subr.mxu0 0.0
    %123 = vmatpush1.msra.mxu0 0.0
    %124 = vmatprep.subr.mxu0 0.0
    %125 = vmatpush1.msra.mxu0 0.0
    %126 = vmatprep.subr.mxu0 0.0
    %127 = vmatpush1.msra.mxu0 0.0
    %128 = vmatprep.subr.mxu0 0.0
    %129 = vmatpush1.msra.mxu0 0.0
    %130 = vmatprep.subr.mxu0 0.0
    %131 = vmatpush1.msra.mxu0 0.0
    %132 = vmatprep.subr.mxu0 0.0
    %133 = vmatpush1.msra.mxu0 0.0
    %134 = vmatprep.subr.mxu0 0.0
    %135 = vmatpush1.msra.mxu0 0.0
    %136 = vmatprep.subr.mxu0 0.0
    %137 = vmatpush1.msra.mxu0 0.0
    %138 = vmatprep.subr.mxu0 0.0
    %139 = vmatpush1.msra.mxu0 0.0
    %140 = vmatprep.subr.mxu0 0.0
    %141 = vmatpush1.msra.mxu0 0.0
    %142 = vmatprep.mubr.f32.mxu0 0.0
    %143 = vmatmul.mubr.f32.gmra.mrb[0].mxu0 %v73
    %v144 = vpop.f32.mrb[0].mxu0
    %v145 = vadd.f32 %v71, %v144
    %v146 = vpop.f32.mrb[0].mxu0
    %147 = vmatprep.mubr.f32.mxu0 0.0
    %148 = vmatmul.mubr.f32.gmra.mrb[0].mxu0 %v76
    %v149 = vpop.f32.mrb[0].mxu0
    %v150 = vadd.f32 %v71, %v149
    %v151 = vpop.f32.mrb[0].mxu0
    %152 = vdwg.mxu0
    %v153 = vlaneseq
    %v154 = vshrl.u32 %v153, 7
    %v155 = vadd.s32 %v154, 8
    %v156 = vlaneseq
    %v157 = vand.u32 %v156, 127
    %v158 = vshra.s32 %v154, 3
    %v159 = vshra.s32 %v155, 3
    %v160 = vshra.s32 %v157, 3
    %vm161 = vcmp.eq.s32.totalorder %v158, %v160
    %vm162 = vcmp.eq.s32.totalorder %v159, %v160
    %165 = vrot.lane.b32.xlu0 %v145, 96
    %v166 = vpop.permute.xlu0 %165
    %167 = vrot.lane.b32.xlu0 %v150, 96
    %v168 = vpop.permute.xlu0 %167
    %vm169 = vcmask 64512
    %v170 = vsel %vm169, %v145, 0
    %v172 = vsel %vm169, %v150, 0
    %v174 = vsel %vm169, %v166, 0
    %v176 = vsel %vm169, %v168, 0
    %178 = vmatprep.subr.mxu0 0.0
    %179 = vmatpush1.xpose.msra.mxu0 %v174
    %180 = vmatprep.subr.mxu0 0.0
    %181 = vmatpush1.xpose.msra.mxu0 %v176
    %182 = vmatprep.subr.mxu0 0.0
    %183 = vmatpush1.xpose.msra.mxu0 0.0
    %184 = vmatprep.subr.mxu0 0.0
    %185 = vmatpush1.xpose.msra.mxu0 0.0
    %186 = vmatprep.subr.mxu0 0.0
    %187 = vmatpush1.xpose.msra.mxu0 0.0
    %188 = vmatprep.subr.mxu0 0.0
    %189 = vmatpush1.xpose.msra.mxu0 0.0
    %190 = vmatprep.subr.mxu0 0.0
    %191 = vmatpush1.xpose.msra.mxu0 0.0
    %192 = vmatprep.subr.mxu0 0.0
    %193 = vmatpush1.xpose.msra.mxu0 0.0
    %194 = vmatprep.subr.mxu0 0.0
    %195 = vmatpush1.xpose.msra.mxu0 0.0
    %196 = vmatprep.subr.mxu0 0.0
    %197 = vmatpush1.xpose.msra.mxu0 0.0
    %198 = vmatprep.subr.mxu0 0.0
    %199 = vmatpush1.xpose.msra.mxu0 0.0
    %200 = vmatprep.subr.mxu0 0.0
    %201 = vmatpush1.xpose.msra.mxu0 0.0
    %202 = vmatprep.subr.mxu0 0.0
    %203 = vmatpush1.xpose.msra.mxu0 0.0
    %204 = vmatprep.subr.mxu0 0.0
    %205 = vmatpush1.xpose.msra.mxu0 0.0
    %206 = vmatprep.subr.mxu0 0.0
    %207 = vmatpush1.xpose.msra.mxu0 0.0
    %208 = vmatprep.subr.mxu0 0.0
    %209 = vmatpush1.xpose.msra.mxu0 0.0
    %210 = vmatprep.subr.mxu0 0.0
    %211 = vmatpush1.xpose.msra.mxu0 0.0
    %212 = vmatprep.subr.mxu0 0.0
    %213 = vmatpush1.xpose.msra.mxu0 0.0
    %214 = vmatprep.subr.mxu0 0.0
    %215 = vmatpush1.xpose.msra.mxu0 0.0
    %216 = vmatprep.subr.mxu0 0.0
    %217 = vmatpush1.xpose.msra.mxu0 0.0
    %218 = vmatprep.subr.mxu0 0.0
    %219 = vmatpush1.xpose.msra.mxu0 0.0
    %220 = vmatprep.subr.mxu0 0.0
    %221 = vmatpush1.xpose.msra.mxu0 0.0
    %222 = vmatprep.subr.mxu0 0.0
    %223 = vmatpush1.xpose.msra.mxu0 0.0
    %224 = vmatprep.subr.mxu0 0.0
    %225 = vmatpush1.xpose.msra.mxu0 0.0
    %226 = vmatprep.subr.mxu0 0.0
    %227 = vmatpush1.xpose.msra.mxu0 0.0
    %228 = vmatprep.subr.mxu0 0.0
    %229 = vmatpush1.xpose.msra.mxu0 0.0
    %230 = vmatprep.subr.mxu0 0.0
    %231 = vmatpush1.xpose.msra.mxu0 0.0
    %232 = vmatprep.subr.mxu0 0.0
    %233 = vmatpush1.xpose.msra.mxu0 0.0
    %234 = vmatprep.subr.mxu0 0.0
    %235 = vmatpush1.xpose.msra.mxu0 0.0
    %236 = vmatprep.subr.mxu0 0.0
    %237 = vmatpush1.xpose.msra.mxu0 0.0
    %238 = vmatprep.subr.mxu0 0.0
    %239 = vmatpush1.xpose.msra.mxu0 0.0
    %240 = vmatprep.subr.mxu0 0.0
    %241 = vmatpush1.xpose.msra.mxu0 0.0
    %242 = vmatprep.mubr.f32.mxu0 0.0
    %243 = vmatmul.mubr.f32.gmra.mrb[0].mxu0 %v170
    %v244 = vpop.f32.mrb[0].mxu0
    %v245 = vadd.f32 0.0, %v244
    %v246 = vpop.f32.mrb[0].mxu0
    %247 = vmatprep.mubr.f32.mxu0 0.0
    %248 = vmatmul.mubr.f32.gmra.mrb[0].mxu0 %v172
    %v249 = vpop.f32.mrb[0].mxu0
    %v250 = vadd.f32 0.0, %v249
    %v251 = vpop.f32.mrb[0].mxu0
    %252 = vdwg.mxu0
    %v253 = vsel %vm161, %v245, -1e+30
    %v254 = vsel %vm162, %v250, -1e+30
    %vm255 = vcmask 130048
    %v256 = vsel %vm255, %v253, -inf
    %257 = vmax.xlane.f32.xlu0 %v256
    %v258 = vpop.xlane.xlu0 %257
    %v259 = vsel %vm255, %v254, -inf
    %260 = vmax.xlane.f32.xlu0 %v259
    %v261 = vpop.xlane.xlu0 %260
    %v262 = vsub.f32 %v253, %v258
    %v263 = vsub.f32 %v254, %v261
    %v264 = vmul.f32 %v262, 1.442695
    %v265 = vpow.pop %v264
    %v266 = vmul.f32 %v263, 1.442695
    %v267 = vpow.pop %v266
    %v268 = vsel %vm255, %v265, 0.0
    %269 = vadd.xlane.f32.xlu0 %v268
    %v270 = vpop.xlane.xlu0 %269
    %v271 = vsel %vm255, %v267, 0.0
    %272 = vadd.xlane.f32.xlu0 %v271
    %v273 = vpop.xlane.xlu0 %272
    %v274 = vrcp.pop %v270
    %v275 = vrcp.pop %v273
    %v276 = vmul.f32 %v265, %v274
    %v277 = vmul.f32 %v267, %v275
    %278 = vrot.lane.b32.xlu0 %v145, 64
    %v279 = vpop.permute.xlu0 %278
    %280 = vrot.lane.b32.xlu0 %v150, 64
    %v281 = vpop.permute.xlu0 %280
    %v285 = vsel %vm255, %v276, 0
    %v288 = vsel %vm255, %v277, 0
    %290 = vmatprep.subr.mxu0 0.0
    %291 = vmatpush1.msra.mxu0 %v279
    %292 = vmatprep.subr.mxu0 0.0
    %293 = vmatpush1.msra.mxu0 %v281
    %294 = vmatprep.subr.mxu0 0.0
    %295 = vmatpush1.msra.mxu0 0.0
    %296 = vmatprep.subr.mxu0 0.0
    %297 = vmatpush1.msra.mxu0 0.0
    %298 = vmatprep.subr.mxu0 0.0
    %299 = vmatpush1.msra.mxu0 0.0
    %300 = vmatprep.subr.mxu0 0.0
    %301 = vmatpush1.msra.mxu0 0.0
    %302 = vmatprep.subr.mxu0 0.0
    %303 = vmatpush1.msra.mxu0 0.0
    %304 = vmatprep.subr.mxu0 0.0
    %305 = vmatpush1.msra.mxu0 0.0
    %306 = vmatprep.subr.mxu0 0.0
    %307 = vmatpush1.msra.mxu0 0.0
    %308 = vmatprep.subr.mxu0 0.0
    %309 = vmatpush1.msra.mxu0 0.0
    %310 = vmatprep.subr.mxu0 0.0
    %311 = vmatpush1.msra.mxu0 0.0
    %312 = vmatprep.subr.mxu0 0.0
    %313 = vmatpush1.msra.mxu0 0.0
    %314 = vmatprep.subr.mxu0 0.0
    %315 = vmatpush1.msra.mxu0 0.0
    %316 = vmatprep.subr.mxu0 0.0
    %317 = vmatpush1.msra.mxu0 0.0
    %318 = vmatprep.subr.mxu0 0.0
    %319 = vmatpush1.msra.mxu0 0.0
    %320 = vmatprep.subr.mxu0 0.0
    %321 = vmatpush1.msra.mxu0 0.0
    %322 = vmatprep.subr.mxu0 0.0
    %323 = vmatpush1.msra.mxu0 0.0
    %324 = vmatprep.subr.mxu0 0.0
    %325 = vmatpush1.msra.mxu0 0.0
    %326 = vmatprep.subr.mxu0 0.0
    %327 = vmatpush1.msra.mxu0 0.0
    %328 = vmatprep.subr.mxu0 0.0
    %329 = vmatpush1.msra.mxu0 0.0
    %330 = vmatprep.subr.mxu0 0.0
    %331 = vmatpush1.msra.mxu0 0.0
    %332 = vmatprep.subr.mxu0 0.0
    %333 = vmatpush1.msra.mxu0 0.0
    %334 = vmatprep.subr.mxu0 0.0
    %335 = vmatpush1.msra.mxu0 0.0
    %336 = vmatprep.subr.mxu0 0.0
    %337 = vmatpush1.msra.mxu0 0.0
    %338 = vmatprep.subr.mxu0 0.0
    %339 = vmatpush1.msra.mxu0 0.0
    %340 = vmatprep.subr.mxu0 0.0
    %341 = vmatpush1.msra.mxu0 0.0
    %342 = vmatprep.subr.mxu0 0.0
    %343 = vmatpush1.msra.mxu0 0.0
    %344 = vmatprep.subr.mxu0 0.0
    %345 = vmatpush1.msra.mxu0 0.0
    %346 = vmatprep.subr.mxu0 0.0
    %347 = vmatpush1.msra.mxu0 0.0
    %348 = vmatprep.subr.mxu0 0.0
    %349 = vmatpush1.msra.mxu0 0.0
    %350 = vmatprep.subr.mxu0 0.0
    %351 = vmatpush1.msra.mxu0 0.0
    %352 = vmatprep.subr.mxu0 0.0
    %353 = vmatpush1.msra.mxu0 0.0
    %354 = vmatprep.mubr.f32.mxu0 0.0
    %355 = vmatmul.mubr.f32.gmra.mrb[0].mxu0 %v285
    %v356 = vpop.f32.mrb[0].mxu0
    %v357 = vadd.f32 0.0, %v356
    %v358 = vpop.f32.mrb[0].mxu0
    %359 = vmatprep.mubr.f32.mxu0 0.0
    %360 = vmatmul.mubr.f32.gmra.mrb[0].mxu0 %v288
    %v361 = vpop.f32.mrb[0].mxu0
    %v362 = vadd.f32 0.0, %v361
    %v363 = vpop.f32.mrb[0].mxu0
    %364 = vdwg.mxu0
    %365 = vrot.lane.b32.xlu0 %v145, 120
    %v366 = vpop.permute.xlu0 %365
    %367 = vrot.lane.b32.xlu0 %v150, 120
    %v368 = vpop.permute.xlu0 %367
    %369 = vrot.lane.b32.xlu0 %v145, 88
    %v370 = vpop.permute.xlu0 %369
    %371 = vrot.lane.b32.xlu0 %v150, 88
    %v372 = vpop.permute.xlu0 %371
    %v373 = vsel %vm169, %v366, 0
    %v375 = vsel %vm169, %v368, 0
    %v377 = vsel %vm169, %v370, 0
    %v379 = vsel %vm169, %v372, 0
    %381 = vmatprep.subr.mxu0 0.0
    %382 = vmatpush1.xpose.msra.mxu0 %v377
    %383 = vmatprep.subr.mxu0 0.0
    %384 = vmatpush1.xpose.msra.mxu0 %v379
    %385 = vmatprep.subr.mxu0 0.0
    %386 = vmatpush1.xpose.msra.mxu0 0.0
    %387 = vmatprep.subr.mxu0 0.0
    %388 = vmatpush1.xpose.msra.mxu0 0.0
    %389 = vmatprep.subr.mxu0 0.0
    %390 = vmatpush1.xpose.msra.mxu0 0.0
    %391 = vmatprep.subr.mxu0 0.0
    %392 = vmatpush1.xpose.msra.mxu0 0.0
    %393 = vmatprep.subr.mxu0 0.0
    %394 = vmatpush1.xpose.msra.mxu0 0.0
    %395 = vmatprep.subr.mxu0 0.0
    %396 = vmatpush1.xpose.msra.mxu0 0.0
    %397 = vmatprep.subr.mxu0 0.0
    %398 = vmatpush1.xpose.msra.mxu0 0.0
    %399 = vmatprep.subr.mxu0 0.0
    %400 = vmatpush1.xpose.msra.mxu0 0.0
    %401 = vmatprep.subr.mxu0 0.0
    %402 = vmatpush1.xpose.msra.mxu0 0.0
    %403 = vmatprep.subr.mxu0 0.0
    %404 = vmatpush1.xpose.msra.mxu0 0.0
    %405 = vmatprep.subr.mxu0 0.0
    %406 = vmatpush1.xpose.msra.mxu0 0.0
    %407 = vmatprep.subr.mxu0 0.0
    %408 = vmatpush1.xpose.msra.mxu0 0.0
    %409 = vmatprep.subr.mxu0 0.0
    %410 = vmatpush1.xpose.msra.mxu0 0.0
    %411 = vmatprep.subr.mxu0 0.0
    %412 = vmatpush1.xpose.msra.mxu0 0.0
    %413 = vmatprep.subr.mxu0 0.0
    %414 = vmatpush1.xpose.msra.mxu0 0.0
    %415 = vmatprep.subr.mxu0 0.0
    %416 = vmatpush1.xpose.msra.mxu0 0.0
    %417 = vmatprep.subr.mxu0 0.0
    %418 = vmatpush1.xpose.msra.mxu0 0.0
    %419 = vmatprep.subr.mxu0 0.0
    %420 = vmatpush1.xpose.msra.mxu0 0.0
    %421 = vmatprep.subr.mxu0 0.0
    %422 = vmatpush1.xpose.msra.mxu0 0.0
    %423 = vmatprep.subr.mxu0 0.0
    %424 = vmatpush1.xpose.msra.mxu0 0.0
    %425 = vmatprep.subr.mxu0 0.0
    %426 = vmatpush1.xpose.msra.mxu0 0.0
    %427 = vmatprep.subr.mxu0 0.0
    %428 = vmatpush1.xpose.msra.mxu0 0.0
    %429 = vmatprep.subr.mxu0 0.0
    %430 = vmatpush1.xpose.msra.mxu0 0.0
    %431 = vmatprep.subr.mxu0 0.0
    %432 = vmatpush1.xpose.msra.mxu0 0.0
    %433 = vmatprep.subr.mxu0 0.0
    %434 = vmatpush1.xpose.msra.mxu0 0.0
    %435 = vmatprep.subr.mxu0 0.0
    %436 = vmatpush1.xpose.msra.mxu0 0.0
    %437 = vmatprep.subr.mxu0 0.0
    %438 = vmatpush1.xpose.msra.mxu0 0.0
    %439 = vmatprep.subr.mxu0 0.0
    %440 = vmatpush1.xpose.msra.mxu0 0.0
    %441 = vmatprep.subr.mxu0 0.0
    %442 = vmatpush1.xpose.msra.mxu0 0.0
    %443 = vmatprep.subr.mxu0 0.0
    %444 = vmatpush1.xpose.msra.mxu0 0.0
    %445 = vmatprep.mubr.f32.mxu0 0.0
    %446 = vmatmul.mubr.f32.gmra.mrb[0].mxu0 %v373
    %v447 = vpop.f32.mrb[0].mxu0
    %v448 = vadd.f32 0.0, %v447
    %v449 = vpop.f32.mrb[0].mxu0
    %450 = vmatprep.mubr.f32.mxu0 0.0
    %451 = vmatmul.mubr.f32.gmra.mrb[0].mxu0 %v375
    %v452 = vpop.f32.mrb[0].mxu0
    %v453 = vadd.f32 0.0, %v452
    %v454 = vpop.f32.mrb[0].mxu0
    %455 = vdwg.mxu0
    %v456 = vsel %vm161, %v448, -1e+30
    %v457 = vsel %vm162, %v453, -1e+30
    %v458 = vsel %vm255, %v456, -inf
    %459 = vmax.xlane.f32.xlu0 %v458
    %v460 = vpop.xlane.xlu0 %459
    %v461 = vsel %vm255, %v457, -inf
    %462 = vmax.xlane.f32.xlu0 %v461
    %v463 = vpop.xlane.xlu0 %462
    %v464 = vsub.f32 %v456, %v460
    %v465 = vsub.f32 %v457, %v463
    %v466 = vmul.f32 %v464, 1.442695
    %v467 = vpow.pop %v466
    %v468 = vmul.f32 %v465, 1.442695
    %v469 = vpow.pop %v468
    %v470 = vsel %vm255, %v467, 0.0
    %471 = vadd.xlane.f32.xlu0 %v470
    %v472 = vpop.xlane.xlu0 %471
    %v473 = vsel %vm255, %v469, 0.0
    %474 = vadd.xlane.f32.xlu0 %v473
    %v475 = vpop.xlane.xlu0 %474
    %v476 = vrcp.pop %v472
    %v477 = vrcp.pop %v475
    %v478 = vmul.f32 %v467, %v476
    %v479 = vmul.f32 %v469, %v477
    %480 = vrot.lane.b32.xlu0 %v145, 56
    %v481 = vpop.permute.xlu0 %480
    %482 = vrot.lane.b32.xlu0 %v150, 56
    %v483 = vpop.permute.xlu0 %482
    %v487 = vsel %vm255, %v478, 0
    %v490 = vsel %vm255, %v479, 0
    %492 = vmatprep.subr.mxu0 0.0
    %493 = vmatpush1.msra.mxu0 %v481
    %494 = vmatprep.subr.mxu0 0.0
    %495 = vmatpush1.msra.mxu0 %v483
    %496 = vmatprep.subr.mxu0 0.0
    %497 = vmatpush1.msra.mxu0 0.0
    %498 = vmatprep.subr.mxu0 0.0
    %499 = vmatpush1.msra.mxu0 0.0
    %500 = vmatprep.subr.mxu0 0.0
    %501 = vmatpush1.msra.mxu0 0.0
    %502 = vmatprep.subr.mxu0 0.0
    %503 = vmatpush1.msra.mxu0 0.0
    %504 = vmatprep.subr.mxu0 0.0
    %505 = vmatpush1.msra.mxu0 0.0
    %506 = vmatprep.subr.mxu0 0.0
    %507 = vmatpush1.msra.mxu0 0.0
    %508 = vmatprep.subr.mxu0 0.0
    %509 = vmatpush1.msra.mxu0 0.0
    %510 = vmatprep.subr.mxu0 0.0
    %511 = vmatpush1.msra.mxu0 0.0
    %512 = vmatprep.subr.mxu0 0.0
    %513 = vmatpush1.msra.mxu0 0.0
    %514 = vmatprep.subr.mxu0 0.0
    %515 = vmatpush1.msra.mxu0 0.0
    %516 = vmatprep.subr.mxu0 0.0
    %517 = vmatpush1.msra.mxu0 0.0
    %518 = vmatprep.subr.mxu0 0.0
    %519 = vmatpush1.msra.mxu0 0.0
    %520 = vmatprep.subr.mxu0 0.0
    %521 = vmatpush1.msra.mxu0 0.0
    %522 = vmatprep.subr.mxu0 0.0
    %523 = vmatpush1.msra.mxu0 0.0
    %524 = vmatprep.subr.mxu0 0.0
    %525 = vmatpush1.msra.mxu0 0.0
    %526 = vmatprep.subr.mxu0 0.0
    %527 = vmatpush1.msra.mxu0 0.0
    %528 = vmatprep.subr.mxu0 0.0
    %529 = vmatpush1.msra.mxu0 0.0
    %530 = vmatprep.subr.mxu0 0.0
    %531 = vmatpush1.msra.mxu0 0.0
    %532 = vmatprep.subr.mxu0 0.0
    %533 = vmatpush1.msra.mxu0 0.0
    %534 = vmatprep.subr.mxu0 0.0
    %535 = vmatpush1.msra.mxu0 0.0
    %536 = vmatprep.subr.mxu0 0.0
    %537 = vmatpush1.msra.mxu0 0.0
    %538 = vmatprep.subr.mxu0 0.0
    %539 = vmatpush1.msra.mxu0 0.0
    %540 = vmatprep.subr.mxu0 0.0
    %541 = vmatpush1.msra.mxu0 0.0
    %542 = vmatprep.subr.mxu0 0.0
    %543 = vmatpush1.msra.mxu0 0.0
    %544 = vmatprep.subr.mxu0 0.0
    %545 = vmatpush1.msra.mxu0 0.0
    %546 = vmatprep.subr.mxu0 0.0
    %547 = vmatpush1.msra.mxu0 0.0
    %548 = vmatprep.subr.mxu0 0.0
    %549 = vmatpush1.msra.mxu0 0.0
    %550 = vmatprep.subr.mxu0 0.0
    %551 = vmatpush1.msra.mxu0 0.0
    %552 = vmatprep.subr.mxu0 0.0
    %553 = vmatpush1.msra.mxu0 0.0
    %554 = vmatprep.subr.mxu0 0.0
    %555 = vmatpush1.msra.mxu0 0.0
    %556 = vmatprep.mubr.f32.mxu0 0.0
    %557 = vmatmul.mubr.f32.gmra.mrb[0].mxu0 %v487
    %v558 = vpop.f32.mrb[0].mxu0
    %v559 = vadd.f32 0.0, %v558
    %v560 = vpop.f32.mrb[0].mxu0
    %561 = vmatprep.mubr.f32.mxu0 0.0
    %562 = vmatmul.mubr.f32.gmra.mrb[0].mxu0 %v490
    %v563 = vpop.f32.mrb[0].mxu0
    %v564 = vadd.f32 0.0, %v563
    %v565 = vpop.f32.mrb[0].mxu0
    %566 = vdwg.mxu0
    %568 = vrot.lane.b32.xlu0 %v65, 32
    %v569 = vpop.permute.xlu0 %568
    %v572 = vsel %vm169, %v559, 0
    %v575 = vsel %vm169, %v564, 0
    %577 = vmatprep.subr.mxu0 0.0
    %578 = vmatpush1.msra.mxu0 %v569
    %579 = vmatprep.subr.mxu0 0.0
    %580 = vmatpush1.msra.mxu0 0.0
    %581 = vmatprep.subr.mxu0 0.0
    %582 = vmatpush1.msra.mxu0 0.0
    %583 = vmatprep.subr.mxu0 0.0
    %584 = vmatpush1.msra.mxu0 0.0
    %585 = vmatprep.subr.mxu0 0.0
    %586 = vmatpush1.msra.mxu0 0.0
    %587 = vmatprep.subr.mxu0 0.0
    %588 = vmatpush1.msra.mxu0 0.0
    %589 = vmatprep.subr.mxu0 0.0
    %590 = vmatpush1.msra.mxu0 0.0
    %591 = vmatprep.subr.mxu0 0.0
    %592 = vmatpush1.msra.mxu0 0.0
    %593 = vmatprep.subr.mxu0 0.0
    %594 = vmatpush1.msra.mxu0 0.0
    %595 = vmatprep.subr.mxu0 0.0
    %596 = vmatpush1.msra.mxu0 0.0
    %597 = vmatprep.subr.mxu0 0.0
    %598 = vmatpush1.msra.mxu0 0.0
    %599 = vmatprep.subr.mxu0 0.0
    %600 = vmatpush1.msra.mxu0 0.0
    %601 = vmatprep.subr.mxu0 0.0
    %602 = vmatpush1.msra.mxu0 0.0
    %603 = vmatprep.subr.mxu0 0.0
    %604 = vmatpush1.msra.mxu0 0.0
    %605 = vmatprep.subr.mxu0 0.0
    %606 = vmatpush1.msra.mxu0 0.0
    %607 = vmatprep.subr.mxu0 0.0
    %608 = vmatpush1.msra.mxu0 0.0
    %609 = vmatprep.subr.mxu0 0.0
    %610 = vmatpush1.msra.mxu0 0.0
    %611 = vmatprep.subr.mxu0 0.0
    %612 = vmatpush1.msra.mxu0 0.0
    %613 = vmatprep.subr.mxu0 0.0
    %614 = vmatpush1.msra.mxu0 0.0
    %615 = vmatprep.subr.mxu0 0.0
    %616 = vmatpush1.msra.mxu0 0.0
    %617 = vmatprep.subr.mxu0 0.0
    %618 = vmatpush1.msra.mxu0 0.0
    %619 = vmatprep.subr.mxu0 0.0
    %620 = vmatpush1.msra.mxu0 0.0
    %621 = vmatprep.subr.mxu0 0.0
    %622 = vmatpush1.msra.mxu0 0.0
    %623 = vmatprep.subr.mxu0 0.0
    %624 = vmatpush1.msra.mxu0 0.0
    %625 = vmatprep.subr.mxu0 0.0
    %626 = vmatpush1.msra.mxu0 0.0
    %627 = vmatprep.subr.mxu0 0.0
    %628 = vmatpush1.msra.mxu0 0.0
    %629 = vmatprep.subr.mxu0 0.0
    %630 = vmatpush1.msra.mxu0 0.0
    %631 = vmatprep.subr.mxu0 0.0
    %632 = vmatpush1.msra.mxu0 0.0
    %633 = vmatprep.subr.mxu0 0.0
    %634 = vmatpush1.msra.mxu0 0.0
    %635 = vmatprep.subr.mxu0 0.0
    %636 = vmatpush1.msra.mxu0 0.0
    %637 = vmatprep.subr.mxu0 0.0
    %638 = vmatpush1.msra.mxu0 0.0
    %639 = vmatprep.subr.mxu0 0.0
    %640 = vmatpush1.msra.mxu0 0.0
    %641 = vmatprep.mubr.f32.mxu0 0.0
    %642 = vmatmul.mubr.f32.gmra.mrb[0].mxu0 %v572
    %v643 = vpop.f32.mrb[0].mxu0
    %v644 = vadd.f32 0.0, %v643
    %v645 = vpop.f32.mrb[0].mxu0
    %646 = vmatprep.mubr.f32.mxu0 0.0
    %647 = vmatmul.mubr.f32.gmra.mrb[0].mxu0 %v575
    %v648 = vpop.f32.mrb[0].mxu0
    %v649 = vadd.f32 0.0, %v648
    %v650 = vpop.f32.mrb[0].mxu0
    %651 = vdwg.mxu0
    %653 = vrot.lane.b32.xlu0 %v64, 32
    %v654 = vpop.permute.xlu0 %653
    %v657 = vsel %vm169, %v357, 0
    %v660 = vsel %vm169, %v362, 0
    %662 = vmatprep.subr.mxu0 0.0
    %663 = vmatpush1.msra.mxu0 %v654
    %664 = vmatprep.subr.mxu0 0.0
    %665 = vmatpush1.msra.mxu0 0.0
    %666 = vmatprep.subr.mxu0 0.0
    %667 = vmatpush1.msra.mxu0 0.0
    %668 = vmatprep.subr.mxu0 0.0
    %669 = vmatpush1.msra.mxu0 0.0
    %670 = vmatprep.subr.mxu0 0.0
    %671 = vmatpush1.msra.mxu0 0.0
    %672 = vmatprep.subr.mxu0 0.0
    %673 = vmatpush1.msra.mxu0 0.0
    %674 = vmatprep.subr.mxu0 0.0
    %675 = vmatpush1.msra.mxu0 0.0
    %676 = vmatprep.subr.mxu0 0.0
    %677 = vmatpush1.msra.mxu0 0.0
    %678 = vmatprep.subr.mxu0 0.0
    %679 = vmatpush1.msra.mxu0 0.0
    %680 = vmatprep.subr.mxu0 0.0
    %681 = vmatpush1.msra.mxu0 0.0
    %682 = vmatprep.subr.mxu0 0.0
    %683 = vmatpush1.msra.mxu0 0.0
    %684 = vmatprep.subr.mxu0 0.0
    %685 = vmatpush1.msra.mxu0 0.0
    %686 = vmatprep.subr.mxu0 0.0
    %687 = vmatpush1.msra.mxu0 0.0
    %688 = vmatprep.subr.mxu0 0.0
    %689 = vmatpush1.msra.mxu0 0.0
    %690 = vmatprep.subr.mxu0 0.0
    %691 = vmatpush1.msra.mxu0 0.0
    %692 = vmatprep.subr.mxu0 0.0
    %693 = vmatpush1.msra.mxu0 0.0
    %694 = vmatprep.subr.mxu0 0.0
    %695 = vmatpush1.msra.mxu0 0.0
    %696 = vmatprep.subr.mxu0 0.0
    %697 = vmatpush1.msra.mxu0 0.0
    %698 = vmatprep.subr.mxu0 0.0
    %699 = vmatpush1.msra.mxu0 0.0
    %700 = vmatprep.subr.mxu0 0.0
    %701 = vmatpush1.msra.mxu0 0.0
    %702 = vmatprep.subr.mxu0 0.0
    %703 = vmatpush1.msra.mxu0 0.0
    %704 = vmatprep.subr.mxu0 0.0
    %705 = vmatpush1.msra.mxu0 0.0
    %706 = vmatprep.subr.mxu0 0.0
    %707 = vmatpush1.msra.mxu0 0.0
    %708 = vmatprep.subr.mxu0 0.0
    %709 = vmatpush1.msra.mxu0 0.0
    %710 = vmatprep.subr.mxu0 0.0
    %711 = vmatpush1.msra.mxu0 0.0
    %712 = vmatprep.subr.mxu0 0.0
    %713 = vmatpush1.msra.mxu0 0.0
    %714 = vmatprep.subr.mxu0 0.0
    %715 = vmatpush1.msra.mxu0 0.0
    %716 = vmatprep.subr.mxu0 0.0
    %717 = vmatpush1.msra.mxu0 0.0
    %718 = vmatprep.subr.mxu0 0.0
    %719 = vmatpush1.msra.mxu0 0.0
    %720 = vmatprep.subr.mxu0 0.0
    %721 = vmatpush1.msra.mxu0 0.0
    %722 = vmatprep.subr.mxu0 0.0
    %723 = vmatpush1.msra.mxu0 0.0
    %724 = vmatprep.subr.mxu0 0.0
    %725 = vmatpush1.msra.mxu0 0.0
    %726 = vmatprep.mubr.f32.mxu0 0.0
    %727 = vmatmul.mubr.f32.gmra.mrb[0].mxu0 %v657
    %v728 = vpop.f32.mrb[0].mxu0
    %v729 = vadd.f32 %v644, %v728
    %v730 = vpop.f32.mrb[0].mxu0
    %731 = vmatprep.mubr.f32.mxu0 0.0
    %732 = vmatmul.mubr.f32.gmra.mrb[0].mxu0 %v660
    %v733 = vpop.f32.mrb[0].mxu0
    %v734 = vadd.f32 %v649, %v733
    %v735 = vpop.f32.mrb[0].mxu0
    %736 = vdwg.mxu0
    %737 = vrot.lane.b32.xlu0 %v145, 112
    %v738 = vpop.permute.xlu0 %737
    %739 = vrot.lane.b32.xlu0 %v150, 112
    %v740 = vpop.permute.xlu0 %739
    %741 = vrot.lane.b32.xlu0 %v145, 80
    %v742 = vpop.permute.xlu0 %741
    %743 = vrot.lane.b32.xlu0 %v150, 80
    %v744 = vpop.permute.xlu0 %743
    %v745 = vsel %vm169, %v738, 0
    %v747 = vsel %vm169, %v740, 0
    %v749 = vsel %vm169, %v742, 0
    %v751 = vsel %vm169, %v744, 0
    %753 = vmatprep.subr.mxu0 0.0
    %754 = vmatpush1.xpose.msra.mxu0 %v749
    %755 = vmatprep.subr.mxu0 0.0
    %756 = vmatpush1.xpose.msra.mxu0 %v751
    %757 = vmatprep.subr.mxu0 0.0
    %758 = vmatpush1.xpose.msra.mxu0 0.0
    %759 = vmatprep.subr.mxu0 0.0
    %760 = vmatpush1.xpose.msra.mxu0 0.0
    %761 = vmatprep.subr.mxu0 0.0
    %762 = vmatpush1.xpose.msra.mxu0 0.0
    %763 = vmatprep.subr.mxu0 0.0
    %764 = vmatpush1.xpose.msra.mxu0 0.0
    %765 = vmatprep.subr.mxu0 0.0
    %766 = vmatpush1.xpose.msra.mxu0 0.0
    %767 = vmatprep.subr.mxu0 0.0
    %768 = vmatpush1.xpose.msra.mxu0 0.0
    %769 = vmatprep.subr.mxu0 0.0
    %770 = vmatpush1.xpose.msra.mxu0 0.0
    %771 = vmatprep.subr.mxu0 0.0
    %772 = vmatpush1.xpose.msra.mxu0 0.0
    %773 = vmatprep.subr.mxu0 0.0
    %774 = vmatpush1.xpose.msra.mxu0 0.0
    %775 = vmatprep.subr.mxu0 0.0
    %776 = vmatpush1.xpose.msra.mxu0 0.0
    %777 = vmatprep.subr.mxu0 0.0
    %778 = vmatpush1.xpose.msra.mxu0 0.0
    %779 = vmatprep.subr.mxu0 0.0
    %780 = vmatpush1.xpose.msra.mxu0 0.0
    %781 = vmatprep.subr.mxu0 0.0
    %782 = vmatpush1.xpose.msra.mxu0 0.0
    %783 = vmatprep.subr.mxu0 0.0
    %784 = vmatpush1.xpose.msra.mxu0 0.0
    %785 = vmatprep.subr.mxu0 0.0
    %786 = vmatpush1.xpose.msra.mxu0 0.0
    %787 = vmatprep.subr.mxu0 0.0
    %788 = vmatpush1.xpose.msra.mxu0 0.0
    %789 = vmatprep.subr.mxu0 0.0
    %790 = vmatpush1.xpose.msra.mxu0 0.0
    %791 = vmatprep.subr.mxu0 0.0
    %792 = vmatpush1.xpose.msra.mxu0 0.0
    %793 = vmatprep.subr.mxu0 0.0
    %794 = vmatpush1.xpose.msra.mxu0 0.0
    %795 = vmatprep.subr.mxu0 0.0
    %796 = vmatpush1.xpose.msra.mxu0 0.0
    %797 = vmatprep.subr.mxu0 0.0
    %798 = vmatpush1.xpose.msra.mxu0 0.0
    %799 = vmatprep.subr.mxu0 0.0
    %800 = vmatpush1.xpose.msra.mxu0 0.0
    %801 = vmatprep.subr.mxu0 0.0
    %802 = vmatpush1.xpose.msra.mxu0 0.0
    %803 = vmatprep.subr.mxu0 0.0
    %804 = vmatpush1.xpose.msra.mxu0 0.0
    %805 = vmatprep.subr.mxu0 0.0
    %806 = vmatpush1.xpose.msra.mxu0 0.0
    %807 = vmatprep.subr.mxu0 0.0
    %808 = vmatpush1.xpose.msra.mxu0 0.0
    %809 = vmatprep.subr.mxu0 0.0
    %810 = vmatpush1.xpose.msra.mxu0 0.0
    %811 = vmatprep.subr.mxu0 0.0
    %812 = vmatpush1.xpose.msra.mxu0 0.0
    %813 = vmatprep.subr.mxu0 0.0
    %814 = vmatpush1.xpose.msra.mxu0 0.0
    %815 = vmatprep.subr.mxu0 0.0
    %816 = vmatpush1.xpose.msra.mxu0 0.0
    %817 = vmatprep.mubr.f32.mxu0 0.0
    %818 = vmatmul.mubr.f32.gmra.mrb[0].mxu0 %v745
    %v819 = vpop.f32.mrb[0].mxu0
    %v820 = vadd.f32 0.0, %v819
    %v821 = vpop.f32.mrb[0].mxu0
    %822 = vmatprep.mubr.f32.mxu0 0.0
    %823 = vmatmul.mubr.f32.gmra.mrb[0].mxu0 %v747
    %v824 = vpop.f32.mrb[0].mxu0
    %v825 = vadd.f32 0.0, %v824
    %v826 = vpop.f32.mrb[0].mxu0
    %827 = vdwg.mxu0
    %v828 = vsel %vm161, %v820, -1e+30
    %v829 = vsel %vm162, %v825, -1e+30
    %v830 = vsel %vm255, %v828, -inf
    %831 = vmax.xlane.f32.xlu0 %v830
    %v832 = vpop.xlane.xlu0 %831
    %v833 = vsel %vm255, %v829, -inf
    %834 = vmax.xlane.f32.xlu0 %v833
    %v835 = vpop.xlane.xlu0 %834
    %v836 = vsub.f32 %v828, %v832
    %v837 = vsub.f32 %v829, %v835
    %v838 = vmul.f32 %v836, 1.442695
    %v839 = vpow.pop %v838
    %v840 = vmul.f32 %v837, 1.442695
    %v841 = vpow.pop %v840
    %v842 = vsel %vm255, %v839, 0.0
    %843 = vadd.xlane.f32.xlu0 %v842
    %v844 = vpop.xlane.xlu0 %843
    %v845 = vsel %vm255, %v841, 0.0
    %846 = vadd.xlane.f32.xlu0 %v845
    %v847 = vpop.xlane.xlu0 %846
    %v848 = vrcp.pop %v844
    %v849 = vrcp.pop %v847
    %v850 = vmul.f32 %v839, %v848
    %v851 = vmul.f32 %v841, %v849
    %852 = vrot.lane.b32.xlu0 %v145, 48
    %v853 = vpop.permute.xlu0 %852
    %854 = vrot.lane.b32.xlu0 %v150, 48
    %v855 = vpop.permute.xlu0 %854
    %v859 = vsel %vm255, %v850, 0
    %v862 = vsel %vm255, %v851, 0
    %864 = vmatprep.subr.mxu0 0.0
    %865 = vmatpush1.msra.mxu0 %v853
    %866 = vmatprep.subr.mxu0 0.0
    %867 = vmatpush1.msra.mxu0 %v855
    %868 = vmatprep.subr.mxu0 0.0
    %869 = vmatpush1.msra.mxu0 0.0
    %870 = vmatprep.subr.mxu0 0.0
    %871 = vmatpush1.msra.mxu0 0.0
    %872 = vmatprep.subr.mxu0 0.0
    %873 = vmatpush1.msra.mxu0 0.0
    %874 = vmatprep.subr.mxu0 0.0
    %875 = vmatpush1.msra.mxu0 0.0
    %876 = vmatprep.subr.mxu0 0.0
    %877 = vmatpush1.msra.mxu0 0.0
    %878 = vmatprep.subr.mxu0 0.0
    %879 = vmatpush1.msra.mxu0 0.0
    %880 = vmatprep.subr.mxu0 0.0
    %881 = vmatpush1.msra.mxu0 0.0
    %882 = vmatprep.subr.mxu0 0.0
    %883 = vmatpush1.msra.mxu0 0.0
    %884 = vmatprep.subr.mxu0 0.0
    %885 = vmatpush1.msra.mxu0 0.0
    %886 = vmatprep.subr.mxu0 0.0
    %887 = vmatpush1.msra.mxu0 0.0
    %888 = vmatprep.subr.mxu0 0.0
    %889 = vmatpush1.msra.mxu0 0.0
    %890 = vmatprep.subr.mxu0 0.0
    %891 = vmatpush1.msra.mxu0 0.0
    %892 = vmatprep.subr.mxu0 0.0
    %893 = vmatpush1.msra.mxu0 0.0
    %894 = vmatprep.subr.mxu0 0.0
    %895 = vmatpush1.msra.mxu0 0.0
    %896 = vmatprep.subr.mxu0 0.0
    %897 = vmatpush1.msra.mxu0 0.0
    %898 = vmatprep.subr.mxu0 0.0
    %899 = vmatpush1.msra.mxu0 0.0
    %900 = vmatprep.subr.mxu0 0.0
    %901 = vmatpush1.msra.mxu0 0.0
    %902 = vmatprep.subr.mxu0 0.0
    %903 = vmatpush1.msra.mxu0 0.0
    %904 = vmatprep.subr.mxu0 0.0
    %905 = vmatpush1.msra.mxu0 0.0
    %906 = vmatprep.subr.mxu0 0.0
    %907 = vmatpush1.msra.mxu0 0.0
    %908 = vmatprep.subr.mxu0 0.0
    %909 = vmatpush1.msra.mxu0 0.0
    %910 = vmatprep.subr.mxu0 0.0
    %911 = vmatpush1.msra.mxu0 0.0
    %912 = vmatprep.subr.mxu0 0.0
    %913 = vmatpush1.msra.mxu0 0.0
    %914 = vmatprep.subr.mxu0 0.0
    %915 = vmatpush1.msra.mxu0 0.0
    %916 = vmatprep.subr.mxu0 0.0
    %917 = vmatpush1.msra.mxu0 0.0
    %918 = vmatprep.subr.mxu0 0.0
    %919 = vmatpush1.msra.mxu0 0.0
    %920 = vmatprep.subr.mxu0 0.0
    %921 = vmatpush1.msra.mxu0 0.0
    %922 = vmatprep.subr.mxu0 0.0
    %923 = vmatpush1.msra.mxu0 0.0
    %924 = vmatprep.subr.mxu0 0.0
    %925 = vmatpush1.msra.mxu0 0.0
    %926 = vmatprep.subr.mxu0 0.0
    %927 = vmatpush1.msra.mxu0 0.0
    %928 = vmatprep.mubr.f32.mxu0 0.0
    %929 = vmatmul.mubr.f32.gmra.mrb[0].mxu0 %v859
    %v930 = vpop.f32.mrb[0].mxu0
    %v931 = vadd.f32 0.0, %v930
    %v932 = vpop.f32.mrb[0].mxu0
    %933 = vmatprep.mubr.f32.mxu0 0.0
    %934 = vmatmul.mubr.f32.gmra.mrb[0].mxu0 %v862
    %v935 = vpop.f32.mrb[0].mxu0
    %v936 = vadd.f32 0.0, %v935
    %v937 = vpop.f32.mrb[0].mxu0
    %938 = vdwg.mxu0
    %940 = vrot.lane.b32.xlu0 %v66, 32
    %v941 = vpop.permute.xlu0 %940
    %v944 = vsel %vm169, %v931, 0
    %v947 = vsel %vm169, %v936, 0
    %949 = vmatprep.subr.mxu0 0.0
    %950 = vmatpush1.msra.mxu0 %v941
    %951 = vmatprep.subr.mxu0 0.0
    %952 = vmatpush1.msra.mxu0 0.0
    %953 = vmatprep.subr.mxu0 0.0
    %954 = vmatpush1.msra.mxu0 0.0
    %955 = vmatprep.subr.mxu0 0.0
    %956 = vmatpush1.msra.mxu0 0.0
    %957 = vmatprep.subr.mxu0 0.0
    %958 = vmatpush1.msra.mxu0 0.0
    %959 = vmatprep.subr.mxu0 0.0
    %960 = vmatpush1.msra.mxu0 0.0
    %961 = vmatprep.subr.mxu0 0.0
    %962 = vmatpush1.msra.mxu0 0.0
    %963 = vmatprep.subr.mxu0 0.0
    %964 = vmatpush1.msra.mxu0 0.0
    %965 = vmatprep.subr.mxu0 0.0
    %966 = vmatpush1.msra.mxu0 0.0
    %967 = vmatprep.subr.mxu0 0.0
    %968 = vmatpush1.msra.mxu0 0.0
    %969 = vmatprep.subr.mxu0 0.0
    %970 = vmatpush1.msra.mxu0 0.0
    %971 = vmatprep.subr.mxu0 0.0
    %972 = vmatpush1.msra.mxu0 0.0
    %973 = vmatprep.subr.mxu0 0.0
    %974 = vmatpush1.msra.mxu0 0.0
    %975 = vmatprep.subr.mxu0 0.0
    %976 = vmatpush1.msra.mxu0 0.0
    %977 = vmatprep.subr.mxu0 0.0
    %978 = vmatpush1.msra.mxu0 0.0
    %979 = vmatprep.subr.mxu0 0.0
    %980 = vmatpush1.msra.mxu0 0.0
    %981 = vmatprep.subr.mxu0 0.0
    %982 = vmatpush1.msra.mxu0 0.0
    %983 = vmatprep.subr.mxu0 0.0
    %984 = vmatpush1.msra.mxu0 0.0
    %985 = vmatprep.subr.mxu0 0.0
    %986 = vmatpush1.msra.mxu0 0.0
    %987 = vmatprep.subr.mxu0 0.0
    %988 = vmatpush1.msra.mxu0 0.0
    %989 = vmatprep.subr.mxu0 0.0
    %990 = vmatpush1.msra.mxu0 0.0
    %991 = vmatprep.subr.mxu0 0.0
    %992 = vmatpush1.msra.mxu0 0.0
    %993 = vmatprep.subr.mxu0 0.0
    %994 = vmatpush1.msra.mxu0 0.0
    %995 = vmatprep.subr.mxu0 0.0
    %996 = vmatpush1.msra.mxu0 0.0
    %997 = vmatprep.subr.mxu0 0.0
    %998 = vmatpush1.msra.mxu0 0.0
    %999 = vmatprep.subr.mxu0 0.0
    %1000 = vmatpush1.msra.mxu0 0.0
    %1001 = vmatprep.subr.mxu0 0.0
    %1002 = vmatpush1.msra.mxu0 0.0
    %1003 = vmatprep.subr.mxu0 0.0
    %1004 = vmatpush1.msra.mxu0 0.0
    %1005 = vmatprep.subr.mxu0 0.0
    %1006 = vmatpush1.msra.mxu0 0.0
    %1007 = vmatprep.subr.mxu0 0.0
    %1008 = vmatpush1.msra.mxu0 0.0
    %1009 = vmatprep.subr.mxu0 0.0
    %1010 = vmatpush1.msra.mxu0 0.0
    %1011 = vmatprep.subr.mxu0 0.0
    %1012 = vmatpush1.msra.mxu0 0.0
    %1013 = vmatprep.mubr.f32.mxu0 0.0
    %1014 = vmatmul.mubr.f32.gmra.mrb[0].mxu0 %v944
    %v1015 = vpop.f32.mrb[0].mxu0
    %v1016 = vadd.f32 0.0, %v1015
    %v1017 = vpop.f32.mrb[0].mxu0
    %1018 = vmatprep.mubr.f32.mxu0 0.0
    %1019 = vmatmul.mubr.f32.gmra.mrb[0].mxu0 %v947
    %v1020 = vpop.f32.mrb[0].mxu0
    %v1021 = vadd.f32 0.0, %v1020
    %v1022 = vpop.f32.mrb[0].mxu0
    %1023 = vdwg.mxu0
    %v1024 = vadd.f32 %v729, %v1016
    %v1025 = vadd.f32 %v734, %v1021
    %1026 = vrot.lane.b32.xlu0 %v145, 104
    %v1027 = vpop.permute.xlu0 %1026
    %1028 = vrot.lane.b32.xlu0 %v150, 104
    %v1029 = vpop.permute.xlu0 %1028
    %1030 = vrot.lane.b32.xlu0 %v145, 72
    %v1031 = vpop.permute.xlu0 %1030
    %1032 = vrot.lane.b32.xlu0 %v150, 72
    %v1033 = vpop.permute.xlu0 %1032
    %v1034 = vsel %vm169, %v1027, 0
    %v1036 = vsel %vm169, %v1029, 0
    %v1038 = vsel %vm169, %v1031, 0
    %v1040 = vsel %vm169, %v1033, 0
    %1042 = vmatprep.subr.mxu0 0.0
    %1043 = vmatpush1.xpose.msra.mxu0 %v1038
    %1044 = vmatprep.subr.mxu0 0.0
    %1045 = vmatpush1.xpose.msra.mxu0 %v1040
    %1046 = vmatprep.subr.mxu0 0.0
    %1047 = vmatpush1.xpose.msra.mxu0 0.0
    %1048 = vmatprep.subr.mxu0 0.0
    %1049 = vmatpush1.xpose.msra.mxu0 0.0
    %1050 = vmatprep.subr.mxu0 0.0
    %1051 = vmatpush1.xpose.msra.mxu0 0.0
    %1052 = vmatprep.subr.mxu0 0.0
    %1053 = vmatpush1.xpose.msra.mxu0 0.0
    %1054 = vmatprep.subr.mxu0 0.0
    %1055 = vmatpush1.xpose.msra.mxu0 0.0
    %1056 = vmatprep.subr.mxu0 0.0
    %1057 = vmatpush1.xpose.msra.mxu0 0.0
    %1058 = vmatprep.subr.mxu0 0.0
    %1059 = vmatpush1.xpose.msra.mxu0 0.0
    %1060 = vmatprep.subr.mxu0 0.0
    %1061 = vmatpush1.xpose.msra.mxu0 0.0
    %1062 = vmatprep.subr.mxu0 0.0
    %1063 = vmatpush1.xpose.msra.mxu0 0.0
    %1064 = vmatprep.subr.mxu0 0.0
    %1065 = vmatpush1.xpose.msra.mxu0 0.0
    %1066 = vmatprep.subr.mxu0 0.0
    %1067 = vmatpush1.xpose.msra.mxu0 0.0
    %1068 = vmatprep.subr.mxu0 0.0
    %1069 = vmatpush1.xpose.msra.mxu0 0.0
    %1070 = vmatprep.subr.mxu0 0.0
    %1071 = vmatpush1.xpose.msra.mxu0 0.0
    %1072 = vmatprep.subr.mxu0 0.0
    %1073 = vmatpush1.xpose.msra.mxu0 0.0
    %1074 = vmatprep.subr.mxu0 0.0
    %1075 = vmatpush1.xpose.msra.mxu0 0.0
    %1076 = vmatprep.subr.mxu0 0.0
    %1077 = vmatpush1.xpose.msra.mxu0 0.0
    %1078 = vmatprep.subr.mxu0 0.0
    %1079 = vmatpush1.xpose.msra.mxu0 0.0
    %1080 = vmatprep.subr.mxu0 0.0
    %1081 = vmatpush1.xpose.msra.mxu0 0.0
    %1082 = vmatprep.subr.mxu0 0.0
    %1083 = vmatpush1.xpose.msra.mxu0 0.0
    %1084 = vmatprep.subr.mxu0 0.0
    %1085 = vmatpush1.xpose.msra.mxu0 0.0
    %1086 = vmatprep.subr.mxu0 0.0
    %1087 = vmatpush1.xpose.msra.mxu0 0.0
    %1088 = vmatprep.subr.mxu0 0.0
    %1089 = vmatpush1.xpose.msra.mxu0 0.0
    %1090 = vmatprep.subr.mxu0 0.0
    %1091 = vmatpush1.xpose.msra.mxu0 0.0
    %1092 = vmatprep.subr.mxu0 0.0
    %1093 = vmatpush1.xpose.msra.mxu0 0.0
    %1094 = vmatprep.subr.mxu0 0.0
    %1095 = vmatpush1.xpose.msra.mxu0 0.0
    %1096 = vmatprep.subr.mxu0 0.0
    %1097 = vmatpush1.xpose.msra.mxu0 0.0
    %1098 = vmatprep.subr.mxu0 0.0
    %1099 = vmatpush1.xpose.msra.mxu0 0.0
    %1100 = vmatprep.subr.mxu0 0.0
    %1101 = vmatpush1.xpose.msra.mxu0 0.0
    %1102 = vmatprep.subr.mxu0 0.0
    %1103 = vmatpush1.xpose.msra.mxu0 0.0
    %1104 = vmatprep.subr.mxu0 0.0
    %1105 = vmatpush1.xpose.msra.mxu0 0.0
    %1106 = vmatprep.mubr.f32.mxu0 0.0
    %1107 = vmatmul.mubr.f32.gmra.mrb[0].mxu0 %v1034
    %v1108 = vpop.f32.mrb[0].mxu0
    %v1109 = vadd.f32 0.0, %v1108
    %v1110 = vpop.f32.mrb[0].mxu0
    %1111 = vmatprep.mubr.f32.mxu0 0.0
    %1112 = vmatmul.mubr.f32.gmra.mrb[0].mxu0 %v1036
    %v1113 = vpop.f32.mrb[0].mxu0
    %v1114 = vadd.f32 0.0, %v1113
    %v1115 = vpop.f32.mrb[0].mxu0
    %1116 = vdwg.mxu0
    %v1117 = vsel %vm161, %v1109, -1e+30
    %v1118 = vsel %vm162, %v1114, -1e+30
    %v1119 = vsel %vm255, %v1117, -inf
    %1120 = vmax.xlane.f32.xlu0 %v1119
    %v1121 = vpop.xlane.xlu0 %1120
    %v1122 = vsel %vm255, %v1118, -inf
    %1123 = vmax.xlane.f32.xlu0 %v1122
    %v1124 = vpop.xlane.xlu0 %1123
    %v1125 = vsub.f32 %v1117, %v1121
    %v1126 = vsub.f32 %v1118, %v1124
    %v1127 = vmul.f32 %v1125, 1.442695
    %v1128 = vpow.pop %v1127
    %v1129 = vmul.f32 %v1126, 1.442695
    %v1130 = vpow.pop %v1129
    %v1131 = vsel %vm255, %v1128, 0.0
    %1132 = vadd.xlane.f32.xlu0 %v1131
    %v1133 = vpop.xlane.xlu0 %1132
    %v1134 = vsel %vm255, %v1130, 0.0
    %1135 = vadd.xlane.f32.xlu0 %v1134
    %v1136 = vpop.xlane.xlu0 %1135
    %v1137 = vrcp.pop %v1133
    %v1138 = vrcp.pop %v1136
    %v1139 = vmul.f32 %v1128, %v1137
    %v1140 = vmul.f32 %v1130, %v1138
    %1141 = vrot.lane.b32.xlu0 %v145, 40
    %v1142 = vpop.permute.xlu0 %1141
    %1143 = vrot.lane.b32.xlu0 %v150, 40
    %v1144 = vpop.permute.xlu0 %1143
    %v1148 = vsel %vm255, %v1139, 0
    %v1151 = vsel %vm255, %v1140, 0
    %1153 = vmatprep.subr.mxu0 0.0
    %1154 = vmatpush1.msra.mxu0 %v1142
    %1155 = vmatprep.subr.mxu0 0.0
    %1156 = vmatpush1.msra.mxu0 %v1144
    %1157 = vmatprep.subr.mxu0 0.0
    %1158 = vmatpush1.msra.mxu0 0.0
    %1159 = vmatprep.subr.mxu0 0.0
    %1160 = vmatpush1.msra.mxu0 0.0
    %1161 = vmatprep.subr.mxu0 0.0
    %1162 = vmatpush1.msra.mxu0 0.0
    %1163 = vmatprep.subr.mxu0 0.0
    %1164 = vmatpush1.msra.mxu0 0.0
    %1165 = vmatprep.subr.mxu0 0.0
    %1166 = vmatpush1.msra.mxu0 0.0
    %1167 = vmatprep.subr.mxu0 0.0
    %1168 = vmatpush1.msra.mxu0 0.0
    %1169 = vmatprep.subr.mxu0 0.0
    %1170 = vmatpush1.msra.mxu0 0.0
    %1171 = vmatprep.subr.mxu0 0.0
    %1172 = vmatpush1.msra.mxu0 0.0
    %1173 = vmatprep.subr.mxu0 0.0
    %1174 = vmatpush1.msra.mxu0 0.0
    %1175 = vmatprep.subr.mxu0 0.0
    %1176 = vmatpush1.msra.mxu0 0.0
    %1177 = vmatprep.subr.mxu0 0.0
    %1178 = vmatpush1.msra.mxu0 0.0
    %1179 = vmatprep.subr.mxu0 0.0
    %1180 = vmatpush1.msra.mxu0 0.0
    %1181 = vmatprep.subr.mxu0 0.0
    %1182 = vmatpush1.msra.mxu0 0.0
    %1183 = vmatprep.subr.mxu0 0.0
    %1184 = vmatpush1.msra.mxu0 0.0
    %1185 = vmatprep.subr.mxu0 0.0
    %1186 = vmatpush1.msra.mxu0 0.0
    %1187 = vmatprep.subr.mxu0 0.0
    %1188 = vmatpush1.msra.mxu0 0.0
    %1189 = vmatprep.subr.mxu0 0.0
    %1190 = vmatpush1.msra.mxu0 0.0
    %1191 = vmatprep.subr.mxu0 0.0
    %1192 = vmatpush1.msra.mxu0 0.0
    %1193 = vmatprep.subr.mxu0 0.0
    %1194 = vmatpush1.msra.mxu0 0.0
    %1195 = vmatprep.subr.mxu0 0.0
    %1196 = vmatpush1.msra.mxu0 0.0
    %1197 = vmatprep.subr.mxu0 0.0
    %1198 = vmatpush1.msra.mxu0 0.0
    %1199 = vmatprep.subr.mxu0 0.0
    %1200 = vmatpush1.msra.mxu0 0.0
    %1201 = vmatprep.subr.mxu0 0.0
    %1202 = vmatpush1.msra.mxu0 0.0
    %1203 = vmatprep.subr.mxu0 0.0
    %1204 = vmatpush1.msra.mxu0 0.0
    %1205 = vmatprep.subr.mxu0 0.0
    %1206 = vmatpush1.msra.mxu0 0.0
    %1207 = vmatprep.subr.mxu0 0.0
    %1208 = vmatpush1.msra.mxu0 0.0
    %1209 = vmatprep.subr.mxu0 0.0
    %1210 = vmatpush1.msra.mxu0 0.0
    %1211 = vmatprep.subr.mxu0 0.0
    %1212 = vmatpush1.msra.mxu0 0.0
    %1213 = vmatprep.subr.mxu0 0.0
    %1214 = vmatpush1.msra.mxu0 0.0
    %1215 = vmatprep.subr.mxu0 0.0
    %1216 = vmatpush1.msra.mxu0 0.0
    %1217 = vmatprep.mubr.f32.mxu0 0.0
    %1218 = vmatmul.mubr.f32.gmra.mrb[0].mxu0 %v1148
    %v1219 = vpop.f32.mrb[0].mxu0
    %v1220 = vadd.f32 0.0, %v1219
    %v1221 = vpop.f32.mrb[0].mxu0
    %1222 = vmatprep.mubr.f32.mxu0 0.0
    %1223 = vmatmul.mubr.f32.gmra.mrb[0].mxu0 %v1151
    %v1224 = vpop.f32.mrb[0].mxu0
    %v1225 = vadd.f32 0.0, %v1224
    %v1226 = vpop.f32.mrb[0].mxu0
    %1227 = vdwg.mxu0
    %1229 = vrot.lane.b32.xlu0 %v67, 32
    %v1230 = vpop.permute.xlu0 %1229
    %v1233 = vsel %vm169, %v1220, 0
    %v1236 = vsel %vm169, %v1225, 0
    %1238 = vmatprep.subr.mxu0 0.0
    %1239 = vmatpush1.msra.mxu0 %v1230
    %1240 = vmatprep.subr.mxu0 0.0
    %1241 = vmatpush1.msra.mxu0 0.0
    %1242 = vmatprep.subr.mxu0 0.0
    %1243 = vmatpush1.msra.mxu0 0.0
    %1244 = vmatprep.subr.mxu0 0.0
    %1245 = vmatpush1.msra.mxu0 0.0
    %1246 = vmatprep.subr.mxu0 0.0
    %1247 = vmatpush1.msra.mxu0 0.0
    %1248 = vmatprep.subr.mxu0 0.0
    %1249 = vmatpush1.msra.mxu0 0.0
    %1250 = vmatprep.subr.mxu0 0.0
    %1251 = vmatpush1.msra.mxu0 0.0
    %1252 = vmatprep.subr.mxu0 0.0
    %1253 = vmatpush1.msra.mxu0 0.0
    %1254 = vmatprep.subr.mxu0 0.0
    %1255 = vmatpush1.msra.mxu0 0.0
    %1256 = vmatprep.subr.mxu0 0.0
    %1257 = vmatpush1.msra.mxu0 0.0
    %1258 = vmatprep.subr.mxu0 0.0
    %1259 = vmatpush1.msra.mxu0 0.0
    %1260 = vmatprep.subr.mxu0 0.0
    %1261 = vmatpush1.msra.mxu0 0.0
    %1262 = vmatprep.subr.mxu0 0.0
    %1263 = vmatpush1.msra.mxu0 0.0
    %1264 = vmatprep.subr.mxu0 0.0
    %1265 = vmatpush1.msra.mxu0 0.0
    %1266 = vmatprep.subr.mxu0 0.0
    %1267 = vmatpush1.msra.mxu0 0.0
    %1268 = vmatprep.subr.mxu0 0.0
    %1269 = vmatpush1.msra.mxu0 0.0
    %1270 = vmatprep.subr.mxu0 0.0
    %1271 = vmatpush1.msra.mxu0 0.0
    %1272 = vmatprep.subr.mxu0 0.0
    %1273 = vmatpush1.msra.mxu0 0.0
    %1274 = vmatprep.subr.mxu0 0.0
    %1275 = vmatpush1.msra.mxu0 0.0
    %1276 = vmatprep.subr.mxu0 0.0
    %1277 = vmatpush1.msra.mxu0 0.0
    %1278 = vmatprep.subr.mxu0 0.0
    %1279 = vmatpush1.msra.mxu0 0.0
    %1280 = vmatprep.subr.mxu0 0.0
    %1281 = vmatpush1.msra.mxu0 0.0
    %1282 = vmatprep.subr.mxu0 0.0
    %1283 = vmatpush1.msra.mxu0 0.0
    %1284 = vmatprep.subr.mxu0 0.0
    %1285 = vmatpush1.msra.mxu0 0.0
    %1286 = vmatprep.subr.mxu0 0.0
    %1287 = vmatpush1.msra.mxu0 0.0
    %1288 = vmatprep.subr.mxu0 0.0
    %1289 = vmatpush1.msra.mxu0 0.0
    %1290 = vmatprep.subr.mxu0 0.0
    %1291 = vmatpush1.msra.mxu0 0.0
    %1292 = vmatprep.subr.mxu0 0.0
    %1293 = vmatpush1.msra.mxu0 0.0
    %1294 = vmatprep.subr.mxu0 0.0
    %1295 = vmatpush1.msra.mxu0 0.0
    %1296 = vmatprep.subr.mxu0 0.0
    %1297 = vmatpush1.msra.mxu0 0.0
    %1298 = vmatprep.subr.mxu0 0.0
    %1299 = vmatpush1.msra.mxu0 0.0
    %1300 = vmatprep.subr.mxu0 0.0
    %1301 = vmatpush1.msra.mxu0 0.0
    %1302 = vmatprep.mubr.f32.mxu0 0.0
    %1303 = vmatmul.mubr.f32.gmra.mrb[0].mxu0 %v1233
    %v1304 = vpop.f32.mrb[0].mxu0
    %v1305 = vadd.f32 0.0, %v1304
    %v1306 = vpop.f32.mrb[0].mxu0
    %1307 = vmatprep.mubr.f32.mxu0 0.0
    %1308 = vmatmul.mubr.f32.gmra.mrb[0].mxu0 %v1236
    %v1309 = vpop.f32.mrb[0].mxu0
    %v1310 = vadd.f32 0.0, %v1309
    %v1311 = vpop.f32.mrb[0].mxu0
    %1312 = vdwg.mxu0
    %v1313 = vadd.f32 %v1024, %v1305
    %v1314 = vadd.f32 %v1025, %v1310
    %v1315 = vadd.f32 %v62, %v1313
    %v1316 = vadd.f32 %v63, %v1314
    %1318 = vrot.lane.b32.xlu0 %v71, 32
    %v1319 = vpop.permute.xlu0 %1318
    %v1321 = vadd.f32 %v1315, %v1319
    %v1322 = vadd.f32 %v1316, %v1319
    %v1323 = vsel %vm24, %v1321, 0.0
    %1324 = vadd.xlane.f32.xlu0 %v1323
    %v1325 = vpop.xlane.xlu0 %1324
    %v1326 = vsel %vm24, %v1322, 0.0
    %1327 = vadd.xlane.f32.xlu0 %v1326
    %v1328 = vpop.xlane.xlu0 %1327
    %v1329 = vmul.f32 %v1325, %v31
    %v1330 = vmul.f32 %v1328, %v31
    %v1331 = vsub.f32 %v1321, %v1329
    %v1332 = vsub.f32 %v1322, %v1330
    %v1333 = vmul.f32 %v1331, %v1331
    %v1334 = vmul.f32 %v1332, %v1332
    %v1335 = vsel %vm24, %v1333, 0.0
    %1336 = vadd.xlane.f32.xlu0 %v1335
    %v1337 = vpop.xlane.xlu0 %1336
    %v1338 = vsel %vm24, %v1334, 0.0
    %1339 = vadd.xlane.f32.xlu0 %v1338
    %v1340 = vpop.xlane.xlu0 %1339
    %v1341 = vmul.f32 %v1337, %v31
    %v1342 = vmul.f32 %v1340, %v31
    %v1343 = vadd.f32 %v1341, 1e-05
    %v1344 = vadd.f32 %v1342, 1e-05
    %v1345 = vrsqrt.pop %v1343
    %v1346 = vrsqrt.pop %v1344
    %v1347 = vmul.f32 %v1331, %v1345
    %v1348 = vmul.f32 %v1332, %v1346
    %1349 = vrot.lane.b32.xlu0 %v55, 64
    %v1350 = vpop.permute.xlu0 %1349
    %v1352 = vmul.f32 %v1347, %v1350
    %v1353 = vmul.f32 %v1348, %v1350
    %1354 = vrot.lane.b32.xlu0 %v55, 32
    %v1355 = vpop.permute.xlu0 %1354
    %v1357 = vadd.f32 %v1352, %v1355
    %v1358 = vadd.f32 %v1353, %v1355
    %v1359 = vld [vmem:[%s1 + $0x8] sm:$0xff]
    %v1360 = vld [vmem:[%s1 + $0x18] sm:$0xff]
    %v1361 = vld [vmem:[%s1 + $0x28] sm:$0xff]
    %v1362 = vld [vmem:[%s1 + $0x38] sm:$0xff]
    %v1363 = vlaneseq
    %v1364 = vshrl.u32 %v1363, 7
    %v1365 = vsub.s32 0, %v1364
    %v1366 = vrot.slane %v22, %v1365
    %v1368 = vsel %vm24, %v1357, 0
    %v1371 = vsel %vm24, %v1358, 0
    %1373 = vmatprep.subr.mxu0 0.0
    %1374 = vmatpush1.msra.mxu0 %v1359
    %1375 = vmatprep.subr.mxu0 0.0
    %1376 = vmatpush1.msra.mxu0 %v1360
    %1377 = vmatprep.subr.mxu0 0.0
    %1378 = vmatpush1.msra.mxu0 %v1361
    %1379 = vmatprep.subr.mxu0 0.0
    %1380 = vmatpush1.msra.mxu0 %v1362
    %1381 = vmatprep.subr.mxu0 0.0
    %1382 = vmatpush1.msra.mxu0 0.0
    %1383 = vmatprep.subr.mxu0 0.0
    %1384 = vmatpush1.msra.mxu0 0.0
    %1385 = vmatprep.subr.mxu0 0.0
    %1386 = vmatpush1.msra.mxu0 0.0
    %1387 = vmatprep.subr.mxu0 0.0
    %1388 = vmatpush1.msra.mxu0 0.0
    %1389 = vmatprep.subr.mxu0 0.0
    %1390 = vmatpush1.msra.mxu0 0.0
    %1391 = vmatprep.subr.mxu0 0.0
    %1392 = vmatpush1.msra.mxu0 0.0
    %1393 = vmatprep.subr.mxu0 0.0
    %1394 = vmatpush1.msra.mxu0 0.0
    %1395 = vmatprep.subr.mxu0 0.0
    %1396 = vmatpush1.msra.mxu0 0.0
    %1397 = vmatprep.subr.mxu0 0.0
    %1398 = vmatpush1.msra.mxu0 0.0
    %1399 = vmatprep.subr.mxu0 0.0
    %1400 = vmatpush1.msra.mxu0 0.0
    %1401 = vmatprep.subr.mxu0 0.0
    %1402 = vmatpush1.msra.mxu0 0.0
    %1403 = vmatprep.subr.mxu0 0.0
    %1404 = vmatpush1.msra.mxu0 0.0
    %1405 = vmatprep.subr.mxu0 0.0
    %1406 = vmatpush1.msra.mxu0 0.0
    %1407 = vmatprep.subr.mxu0 0.0
    %1408 = vmatpush1.msra.mxu0 0.0
    %1409 = vmatprep.subr.mxu0 0.0
    %1410 = vmatpush1.msra.mxu0 0.0
    %1411 = vmatprep.subr.mxu0 0.0
    %1412 = vmatpush1.msra.mxu0 0.0
    %1413 = vmatprep.subr.mxu0 0.0
    %1414 = vmatpush1.msra.mxu0 0.0
    %1415 = vmatprep.subr.mxu0 0.0
    %1416 = vmatpush1.msra.mxu0 0.0
    %1417 = vmatprep.subr.mxu0 0.0
    %1418 = vmatpush1.msra.mxu0 0.0
    %1419 = vmatprep.subr.mxu0 0.0
    %1420 = vmatpush1.msra.mxu0 0.0
    %1421 = vmatprep.subr.mxu0 0.0
    %1422 = vmatpush1.msra.mxu0 0.0
    %1423 = vmatprep.subr.mxu0 0.0
    %1424 = vmatpush1.msra.mxu0 0.0
    %1425 = vmatprep.subr.mxu0 0.0
    %1426 = vmatpush1.msra.mxu0 0.0
    %1427 = vmatprep.subr.mxu0 0.0
    %1428 = vmatpush1.msra.mxu0 0.0
    %1429 = vmatprep.subr.mxu0 0.0
    %1430 = vmatpush1.msra.mxu0 0.0
    %1431 = vmatprep.subr.mxu0 0.0
    %1432 = vmatpush1.msra.mxu0 0.0
    %1433 = vmatprep.subr.mxu0 0.0
    %1434 = vmatpush1.msra.mxu0 0.0
    %1435 = vmatprep.subr.mxu0 0.0
    %1436 = vmatpush1.msra.mxu0 0.0
    %1437 = vmatprep.mubr.f32.mxu0 0.0
    %1438 = vmatmul.mubr.f32.gmra.mrb[0].mxu0 %v1368
    %v1439 = vpop.f32.mrb[0].mxu0
    %v1440 = vadd.f32 %v1366, %v1439
    %v1441 = vpop.f32.mrb[0].mxu0
    %1442 = vmatprep.mubr.f32.mxu0 0.0
    %1443 = vmatmul.mubr.f32.gmra.mrb[0].mxu0 %v1371
    %v1444 = vpop.f32.mrb[0].mxu0
    %v1445 = vadd.f32 %v1366, %v1444
    %v1446 = vpop.f32.mrb[0].mxu0
    %1447 = vdwg.mxu0
    %v1448 = vmul.f32 %v1440, 0.5
    %v1449 = vmul.f32 %v1445, 0.5
    %v1450 = vmul.f32 %v1440, 0.70710677
    %v1451 = vmul.f32 %v1445, 0.70710677
    %v1452 = verf.f32.pop %v1450
    %v1453 = verf.f32.pop %v1451
    %v1454 = vadd.f32 %v1452, 1.0
    %v1455 = vadd.f32 %v1453, 1.0
    %v1456 = vmul.f32 %v1448, %v1454
    %v1457 = vmul.f32 %v1449, %v1455
    %v1458 = vld [vmem:[%s2] sm:$0xff]
    %v1459 = vld [vmem:[%s2 + $0x8] sm:$0xff]
    %v1460 = vld [vmem:[%s2 + $0x10] sm:$0xff]
    %v1461 = vld [vmem:[%s2 + $0x18] sm:$0xff]
    %v1462 = vld [vmem:[%s2 + $0x20] sm:$0xff]
    %v1463 = vld [vmem:[%s2 + $0x28] sm:$0xff]
    %v1464 = vld [vmem:[%s2 + $0x30] sm:$0xff]
    %v1465 = vld [vmem:[%s2 + $0x38] sm:$0xff]
    %v1466 = vld [vmem:[%s2 + $0x40] sm:$0xff]
    %v1467 = vld [vmem:[%s2 + $0x48] sm:$0xff]
    %v1468 = vld [vmem:[%s2 + $0x50] sm:$0xff]
    %v1469 = vld [vmem:[%s2 + $0x58] sm:$0xff]
    %v1470 = vld [vmem:[%s2 + $0x60] sm:$0xff]
    %v1471 = vld [vmem:[%s2 + $0x68] sm:$0xff]
    %v1472 = vld [vmem:[%s2 + $0x70] sm:$0xff]
    %v1473 = vld [vmem:[%s2 + $0x78] sm:$0xff]
    %v1474 = vlaneseq
    %v1475 = vshrl.u32 %v1474, 7
    %v1476 = vsub.s32 0, %v1475
    %v1477 = vrot.slane %v23, %v1476
    %1478 = vmatprep.subr.mxu0 0.0
    %1479 = vmatpush1.msra.mxu0 %v1458
    %1480 = vmatprep.subr.mxu0 0.0
    %1481 = vmatpush1.msra.mxu0 %v1459
    %1482 = vmatprep.subr.mxu0 0.0
    %1483 = vmatpush1.msra.mxu0 %v1460
    %1484 = vmatprep.subr.mxu0 0.0
    %1485 = vmatpush1.msra.mxu0 %v1461
    %1486 = vmatprep.subr.mxu0 0.0
    %1487 = vmatpush1.msra.mxu0 %v1462
    %1488 = vmatprep.subr.mxu0 0.0
    %1489 = vmatpush1.msra.mxu0 %v1463
    %1490 = vmatprep.subr.mxu0 0.0
    %1491 = vmatpush1.msra.mxu0 %v1464
    %1492 = vmatprep.subr.mxu0 0.0
    %1493 = vmatpush1.msra.mxu0 %v1465
    %1494 = vmatprep.subr.mxu0 0.0
    %1495 = vmatpush1.msra.mxu0 %v1466
    %1496 = vmatprep.subr.mxu0 0.0
    %1497 = vmatpush1.msra.mxu0 %v1467
    %1498 = vmatprep.subr.mxu0 0.0
    %1499 = vmatpush1.msra.mxu0 %v1468
    %1500 = vmatprep.subr.mxu0 0.0
    %1501 = vmatpush1.msra.mxu0 %v1469
    %1502 = vmatprep.subr.mxu0 0.0
    %1503 = vmatpush1.msra.mxu0 %v1470
    %1504 = vmatprep.subr.mxu0 0.0
    %1505 = vmatpush1.msra.mxu0 %v1471
    %1506 = vmatprep.subr.mxu0 0.0
    %1507 = vmatpush1.msra.mxu0 %v1472
    %1508 = vmatprep.subr.mxu0 0.0
    %1509 = vmatpush1.msra.mxu0 %v1473
    %1510 = vmatprep.subr.mxu0 0.0
    %1511 = vmatpush1.msra.mxu0 0.0
    %1512 = vmatprep.subr.mxu0 0.0
    %1513 = vmatpush1.msra.mxu0 0.0
    %1514 = vmatprep.subr.mxu0 0.0
    %1515 = vmatpush1.msra.mxu0 0.0
    %1516 = vmatprep.subr.mxu0 0.0
    %1517 = vmatpush1.msra.mxu0 0.0
    %1518 = vmatprep.subr.mxu0 0.0
    %1519 = vmatpush1.msra.mxu0 0.0
    %1520 = vmatprep.subr.mxu0 0.0
    %1521 = vmatpush1.msra.mxu0 0.0
    %1522 = vmatprep.subr.mxu0 0.0
    %1523 = vmatpush1.msra.mxu0 0.0
    %1524 = vmatprep.subr.mxu0 0.0
    %1525 = vmatpush1.msra.mxu0 0.0
    %1526 = vmatprep.subr.mxu0 0.0
    %1527 = vmatpush1.msra.mxu0 0.0
    %1528 = vmatprep.subr.mxu0 0.0
    %1529 = vmatpush1.msra.mxu0 0.0
    %1530 = vmatprep.subr.mxu0 0.0
    %1531 = vmatpush1.msra.mxu0 0.0
    %1532 = vmatprep.subr.mxu0 0.0
    %1533 = vmatpush1.msra.mxu0 0.0
    %1534 = vmatprep.subr.mxu0 0.0
    %1535 = vmatpush1.msra.mxu0 0.0
    %1536 = vmatprep.subr.mxu0 0.0
    %1537 = vmatpush1.msra.mxu0 0.0
    %1538 = vmatprep.subr.mxu0 0.0
    %1539 = vmatpush1.msra.mxu0 0.0
    %1540 = vmatprep.subr.mxu0 0.0
    %1541 = vmatpush1.msra.mxu0 0.0
    %1542 = vmatprep.mubr.f32.mxu0 0.0
    %1543 = vmatmul.mubr.f32.gmra.mrb[0].mxu0 %v1456
    %v1544 = vpop.f32.mrb[0].mxu0
    %v1545 = vadd.f32 %v1477, %v1544
    %v1546 = vpop.f32.mrb[0].mxu0
    %1547 = vmatprep.mubr.f32.mxu0 0.0
    %1548 = vmatmul.mubr.f32.gmra.mrb[0].mxu0 %v1457
    %v1549 = vpop.f32.mrb[0].mxu0
    %v1550 = vadd.f32 %v1477, %v1549
    %v1551 = vpop.f32.mrb[0].mxu0
    %1552 = vdwg.mxu0
    %v1553 = vadd.f32 %v1357, %v1545
    %v1554 = vadd.f32 %v1358, %v1550
    %1555 = vst.msk [vmem:[#allocation2] sm:$0xff] %vm24, %v1553
    %1556 = vst.msk [vmem:[#allocation2 + $0x8] sm:$0xff] %vm24, %v1554
    // Predicated region
    $region18: #{block_forward.1} parent=1 // pred_check
      _
    $region19: #{block_forward.1} parent=1 // pred_check_branch
      %1558 = sbr.rel (0) target = $region21
    $region20: #{block_forward.1} parent=1 // pred_region
      %s1560 = ssub.s32 256, 256
      %1561 = vsyncadd [#allocation3], %s1560
      %s1562 = sshll.u32 [#allocation2], 4
      %s1563 = int_to_ptr.vmem [resolvable:$true] %s1562
      %1568 = dma.vmem_to_hbm [thread:$0]  %s1563, 256, %s4, [#allocation3], 128, 128, 8
    $region21: #{block_forward.1} parent=1 // pred_fallthru
      _
    // Predicated region
    $region22: #{block_forward.1} parent=1 // pred_check
      _
    $region23: #{block_forward.1} parent=1 // pred_check_branch
      %1570 = sbr.rel (0) target = $region25
    $region24: #{block_forward.1} parent=1 // pred_region
      %1571 = dma.done [#allocation3], 256
    $region25: #{block_forward.1} parent=1 // pred_fallthru
      _
    %1572 = vsyncpa [#allocation3], 1

</llo_original>
